<compile_context>
chip_gen: v7x
topology: tpu7x:2x2x1
jax: 0.10.0
libtpu: 0.0.40
codegen_flags: <defaults>
</compile_context>

<pallas_src>
import jax
import jax.numpy as jnp
from jax.experimental import pallas as pl
from jax.experimental.pallas import tpu as pltpu


def _masklm_mlp_kernel(x_ref, w1_ref, b1_ref, g_ref, beta_ref, w2_ref, b2_ref,
                       o_ref, h_ref):
    """Computes one (tm, tn) tile of the MaskLM logits.

    Grid is (row_tiles, vocab_tiles) with the vocab axis innermost.  The
    Linear -> ReLU -> LayerNorm front end is evaluated once per row tile (at
    vocab index 0) and cached in the VMEM scratch `h_ref`; each vocab step is
    then a single bf16 MXU matmul against the streamed w2 tile.
    """
    j = pl.program_id(1)

    @pl.when(j == 0)
    def _():
        # Linear(num_inputs -> num_hiddens): bf16 MXU matmul, f32 accumulate.
        h = jnp.dot(x_ref[...], w1_ref[...],
                    preferred_element_type=jnp.float32)
        h = h + b1_ref[...]
        # ReLU
        h = jnp.maximum(h, 0.0)
        # LayerNorm(num_hiddens): biased variance, eps=1e-5 (PyTorch default),
        # elementwise affine -- all in f32.
        mean = jnp.mean(h, axis=-1, keepdims=True)
        var = jnp.mean((h - mean) * (h - mean), axis=-1, keepdims=True)
        h = (h - mean) * jax.lax.rsqrt(var + 1e-5)
        h = h * g_ref[...] + beta_ref[...]
        h_ref[...] = h.astype(h_ref.dtype)

    # Linear(num_hiddens -> vocab tile): bf16 MXU matmul, f32 accumulate.
    y = jnp.dot(h_ref[...], w2_ref[...], preferred_element_type=jnp.float32)
    y = y + b2_ref[...]
    o_ref[...] = y.astype(o_ref.dtype)


def masklm_forward(X, pred_positions, params, *, tm=128, tn=512):
    """Pallas implementation of MaskLM.forward (mlm head of LSCPP_BERTModel).

    X: (batch, seq_len, num_inputs) float32
    pred_positions: (batch, num_pred) int32
    params: dict with w1 (D,H), b1 (H,), gamma (H,), beta (H,), w2 (H,V), b2 (V,)
    returns: (batch, num_pred, vocab_size) float32

    tm: row tile (128 works on all generations; 256 fills v6e/v7x MXU rows).
    tn: vocab tile (multiple of 128; 512 keeps the bf16 w2 working set ~1.5 MiB
        double-buffered at H=768).
    """
    batch, seq_len, num_inputs = X.shape
    num_pred = pred_positions.shape[1]

    # ---- gather (indexing glue, plain JAX) ---------------------------------
    pos_flat = pred_positions.reshape(-1)                       # (B*P,)
    batch_idx = jnp.repeat(jnp.arange(batch), num_pred)         # (B*P,)
    masked_X = X[batch_idx, pos_flat]                           # (B*P, D)

    M = batch * num_pred

    w1 = params["w1"]
    b1 = params["b1"].reshape(1, -1).astype(jnp.float32)
    gamma = params["gamma"].reshape(1, -1).astype(jnp.float32)
    beta = params["beta"].reshape(1, -1).astype(jnp.float32)
    w2 = params["w2"]
    b2 = params["b2"].reshape(1, -1).astype(jnp.float32)

    num_hiddens = w1.shape[1]
    vocab_size = w2.shape[1]

    # bf16 for the MXU input streams (weights + activations); accumulation and
    # the LayerNorm stay in f32 inside the kernel.
    masked_X = masked_X.astype(jnp.bfloat16)
    w1 = w1.astype(jnp.bfloat16)
    w2 = w2.astype(jnp.bfloat16)

    # ---- pad rows and vocab to full tiles (no divisibility assert) ---------
    n_row_tiles = pl.cdiv(M, tm)
    n_vocab_tiles = pl.cdiv(vocab_size, tn)
    m_pad = n_row_tiles * tm
    v_pad = n_vocab_tiles * tn
    if m_pad != M:
        masked_X = jnp.pad(masked_X, ((0, m_pad - M), (0, 0)))
    if v_pad != vocab_size:
        w2 = jnp.pad(w2, ((0, 0), (0, v_pad - vocab_size)))
        b2 = jnp.pad(b2, ((0, 0), (0, v_pad - vocab_size)))

    grid = (n_row_tiles, n_vocab_tiles)

    out = pl.pallas_call(
        _masklm_mlp_kernel,
        out_shape=jax.ShapeDtypeStruct((m_pad, v_pad), jnp.float32),
        grid_spec=pltpu.PrefetchScalarGridSpec(
            num_scalar_prefetch=0,
            grid=grid,
            in_specs=[
                # gathered-token rows: revisit the same tile across vocab steps
                pl.BlockSpec((tm, num_inputs), lambda i, j: (i, 0)),
                # first-layer weights / LN params: resident
                pl.BlockSpec((num_inputs, num_hiddens), lambda i, j: (0, 0)),
                pl.BlockSpec((1, num_hiddens), lambda i, j: (0, 0)),
                pl.BlockSpec((1, num_hiddens), lambda i, j: (0, 0)),
                pl.BlockSpec((1, num_hiddens), lambda i, j: (0, 0)),
                # vocab projection: streamed tile-by-tile along the vocab axis
                pl.BlockSpec((num_hiddens, tn), lambda i, j: (0, j)),
                pl.BlockSpec((1, tn), lambda i, j: (0, j)),
            ],
            out_specs=pl.BlockSpec((tm, tn), lambda i, j: (i, j)),
            scratch_shapes=[pltpu.VMEM((tm, num_hiddens), jnp.bfloat16)],
        ),
        compiler_params=pltpu.CompilerParams(
            # rows parallel (megacore), vocab arbitrary (required so the
            # pl.when(j == 0) h-cache init is never skipped on a shard).
            dimension_semantics=("parallel", "arbitrary"),
            vmem_limit_bytes=48 * 1024 * 1024,
        ),
    )(masked_X, w1, b1, gamma, beta, w2, b2)

    out = out[:M, :vocab_size]
    return out.reshape(batch, num_pred, vocab_size)


def _reference_forward(X, pred_positions, params):
    """Pure-JAX f32 reference matching MaskLM.forward semantics."""
    batch, _, _ = X.shape
    num_pred = pred_positions.shape[1]
    pos_flat = pred_positions.reshape(-1)
    batch_idx = jnp.repeat(jnp.arange(batch), num_pred)
    masked_X = X[batch_idx, pos_flat].reshape(batch, num_pred, -1)

    h = masked_X @ params["w1"] + params["b1"]
    h = jnp.maximum(h, 0.0)
    mean = jnp.mean(h, axis=-1, keepdims=True)
    var = jnp.mean((h - mean) ** 2, axis=-1, keepdims=True)
    h = (h - mean) / jnp.sqrt(var + 1e-5) * params["gamma"] + params["beta"]
    return h @ params["w2"] + params["b2"]


if __name__ == "__main__":
    # Small, module-consistent shapes.  vocab_size=1000 is deliberately not a
    # multiple of tn so the pad-and-slice path (and >1 vocab tile, i.e. the
    # h-cache reuse) is exercised; M = batch*num_pred = 8 exercises row padding.
    batch, seq_len = 2, 8
    num_inputs, num_hiddens, vocab_size = 256, 128, 1000
    num_pred = 4

    key = jax.random.PRNGKey(0)
    kx, kp, k1, k2, k3, k4 = jax.random.split(key, 6)

    X = jax.random.normal(kx, (batch, seq_len, num_inputs), dtype=jnp.float32)
    pred_positions = jax.random.randint(kp, (batch, num_pred), 0, seq_len,
                                        dtype=jnp.int32)

    # Deterministic parameter init (synthetic; shapes from the nn.Sequential).
    params = {
        "w1": jax.random.normal(k1, (num_inputs, num_hiddens),
                                dtype=jnp.float32) * 0.05,
        "b1": jax.random.normal(k2, (num_hiddens,), dtype=jnp.float32) * 0.01,
        "gamma": jnp.ones((num_hiddens,), dtype=jnp.float32),
        "beta": jnp.zeros((num_hiddens,), dtype=jnp.float32),
        "w2": jax.random.normal(k3, (num_hiddens, vocab_size),
                                dtype=jnp.float32) * 0.05,
        "b2": jax.random.normal(k4, (vocab_size,), dtype=jnp.float32) * 0.01,
    }

    y = masklm_forward(X, pred_positions, params)
    y = jax.block_until_ready(y)

    y_ref = _reference_forward(X, pred_positions, params)
    assert y.shape == (batch, num_pred, vocab_size)
    # bf16 matmuls vs. f32 reference: looser tolerance per review guidance.
    assert jnp.allclose(y, y_ref, atol=5e-2, rtol=5e-2), "mismatch vs reference"

    print("KERNEL_OK")
</pallas_src>

<mosaic_0001>
module attributes {stable_mosaic.version = 11 : i64} {
  func.func @_masklm_mlp_kernel(%arg0: i32, %arg1: i32, %arg2: memref<128x256xbf16, #tpu.memory_space<vmem>>, %arg3: memref<256x128xbf16, #tpu.memory_space<vmem>>, %arg4: memref<1x128xf32, #tpu.memory_space<vmem>>, %arg5: memref<1x128xf32, #tpu.memory_space<vmem>>, %arg6: memref<1x128xf32, #tpu.memory_space<vmem>>, %arg7: memref<128x512xbf16, #tpu.memory_space<vmem>>, %arg8: memref<1x512xf32, #tpu.memory_space<vmem>>, %arg9: memref<128x512xf32, #tpu.memory_space<vmem>>, %arg10: memref<128x128xbf16, #tpu.memory_space<vmem>>) attributes {dimension_semantics = [#tpu.dimension_semantics<parallel>, #tpu.dimension_semantics<arbitrary>], iteration_bounds = array<i64: 1, 2>, scalar_prefetch = 0 : i64, scratch_operands = 1 : i64, tpu.core_type = #tpu.core_type<tc>, window_params = [{transform_indices = @transform_0, window_bounds = array<i64: 128, 256>}, {pipeline_mode = #tpu.pipeline_mode<synchronous>, transform_indices = @transform_1, window_bounds = array<i64: 256, 128>}, {pipeline_mode = #tpu.pipeline_mode<synchronous>, transform_indices = @transform_2, window_bounds = array<i64: 1, 128>}, {pipeline_mode = #tpu.pipeline_mode<synchronous>, transform_indices = @transform_3, window_bounds = array<i64: 1, 128>}, {pipeline_mode = #tpu.pipeline_mode<synchronous>, transform_indices = @transform_4, window_bounds = array<i64: 1, 128>}, {transform_indices = @transform_5, window_bounds = array<i64: 128, 512>}, {transform_indices = @transform_6, window_bounds = array<i64: 1, 512>}, {transform_indices = @transform_7, window_bounds = array<i64: 128, 512>}]} {
    %c0_i32 = arith.constant 0 : i32
    %0 = arith.cmpi eq, %arg1, %c0_i32 : i32
    %1 = arith.extui %0 : i1 to i32
    %c0_i32_0 = arith.constant 0 : i32
    %2 = arith.cmpi ne, %1, %c0_i32_0 : i32
    scf.if %2 {
      %c0_8 = arith.constant 0 : index
      %c0_9 = arith.constant 0 : index
      %10 = vector.load %arg2[%c0_8, %c0_9] : memref<128x256xbf16, #tpu.memory_space<vmem>>, vector<128x256xbf16>
      %c0_10 = arith.constant 0 : index
      %c0_11 = arith.constant 0 : index
      %11 = vector.load %arg3[%c0_10, %c0_11] : memref<256x128xbf16, #tpu.memory_space<vmem>>, vector<256x128xbf16>
      %cst_12 = arith.constant dense<0.000000e+00> : vector<128x128xf32>
      %12 = tpu.matmul %10, %11, %cst_12 {dimension_numbers = #tpu.dot_dimension_numbers<[1], [0], [0], [1], [0, 0, 1, 1], [], []>} : vector<128x256xbf16>, vector<256x128xbf16>, vector<128x128xf32> -> vector<128x128xf32>
      %c0_13 = arith.constant 0 : index
      %c0_14 = arith.constant 0 : index
      %13 = vector.load %arg4[%c0_13, %c0_14] : memref<1x128xf32, #tpu.memory_space<vmem>>, vector<1x128xf32>
      %14 = vector.broadcast %13 : vector<1x128xf32> to vector<128x128xf32>
      %15 = arith.addf %12, %14 : vector<128x128xf32>
      %cst_15 = arith.constant 0.000000e+00 : f32
      %16 = vector.broadcast %cst_15 : f32 to vector<128x128xf32>
      %17 = arith.maximumf %15, %16 : vector<128x128xf32>
      %cst_16 = arith.constant dense<0.000000e+00> : vector<128xf32>
      %18 = vector.multi_reduction <add>, %17, %cst_16 [1] : vector<128x128xf32> to vector<128xf32>
      %19 = vector.shape_cast %18 : vector<128xf32> to vector<128x1xf32>
      %cst_17 = arith.constant 1.280000e+02 : f32
      %20 = vector.broadcast %cst_17 : f32 to vector<128x1xf32>
      %21 = arith.divf %19, %20 : vector<128x1xf32>
      %22 = vector.broadcast %21 : vector<128x1xf32> to vector<128x128xf32>
      %23 = arith.subf %17, %22 : vector<128x128xf32>
      %24 = vector.broadcast %21 : vector<128x1xf32> to vector<128x128xf32>
      %25 = arith.subf %17, %24 : vector<128x128xf32>
      %26 = arith.mulf %23, %25 : vector<128x128xf32>
      %cst_18 = arith.constant dense<0.000000e+00> : vector<128xf32>
      %27 = vector.multi_reduction <add>, %26, %cst_18 [1] : vector<128x128xf32> to vector<128xf32>
      %28 = vector.shape_cast %27 : vector<128xf32> to vector<128x1xf32>
      %cst_19 = arith.constant 1.280000e+02 : f32
      %29 = vector.broadcast %cst_19 : f32 to vector<128x1xf32>
      %30 = arith.divf %28, %29 : vector<128x1xf32>
      %31 = vector.broadcast %21 : vector<128x1xf32> to vector<128x128xf32>
      %32 = arith.subf %17, %31 : vector<128x128xf32>
      %cst_20 = arith.constant 9.99999974E-6 : f32
      %33 = vector.broadcast %cst_20 : f32 to vector<128x1xf32>
      %34 = arith.addf %30, %33 : vector<128x1xf32>
      %35 = math.rsqrt %34 : vector<128x1xf32>
      %36 = vector.broadcast %35 : vector<128x1xf32> to vector<128x128xf32>
      %37 = arith.mulf %32, %36 : vector<128x128xf32>
      %c0_21 = arith.constant 0 : index
      %c0_22 = arith.constant 0 : index
      %38 = vector.load %arg5[%c0_21, %c0_22] : memref<1x128xf32, #tpu.memory_space<vmem>>, vector<1x128xf32>
      %39 = vector.broadcast %38 : vector<1x128xf32> to vector<128x128xf32>
      %40 = arith.mulf %37, %39 : vector<128x128xf32>
      %c0_23 = arith.constant 0 : index
      %c0_24 = arith.constant 0 : index
      %41 = vector.load %arg6[%c0_23, %c0_24] : memref<1x128xf32, #tpu.memory_space<vmem>>, vector<1x128xf32>
      %42 = vector.broadcast %41 : vector<1x128xf32> to vector<128x128xf32>
      %43 = arith.addf %40, %42 : vector<128x128xf32>
      %44 = arith.truncf %43 : vector<128x128xf32> to vector<128x128xbf16>
      %c0_25 = arith.constant 0 : index
      %c0_26 = arith.constant 0 : index
      %45 = vector.load %arg10[%c0_25, %c0_26] : memref<128x128xbf16, #tpu.memory_space<vmem>>, vector<128x128xbf16>
      tpu.vector_store %arg10[%c0_25, %c0_26], %44 {strides = array<i32>} : memref<128x128xbf16, #tpu.memory_space<vmem>>, vector<128x128xbf16>,
    } else {
    }
    %c0 = arith.constant 0 : index
    %c0_1 = arith.constant 0 : index
    %3 = vector.load %arg10[%c0, %c0_1] : memref<128x128xbf16, #tpu.memory_space<vmem>>, vector<128x128xbf16>
    %c0_2 = arith.constant 0 : index
    %c0_3 = arith.constant 0 : index
    %4 = vector.load %arg7[%c0_2, %c0_3] : memref<128x512xbf16, #tpu.memory_space<vmem>>, vector<128x512xbf16>
    %cst = arith.constant dense<0.000000e+00> : vector<128x512xf32>
    %5 = tpu.matmul %3, %4, %cst {dimension_numbers = #tpu.dot_dimension_numbers<[1], [0], [0], [1], [0, 0, 1, 1], [], []>} : vector<128x128xbf16>, vector<128x512xbf16>, vector<128x512xf32> -> vector<128x512xf32>
    %c0_4 = arith.constant 0 : index
    %c0_5 = arith.constant 0 : index
    %6 = vector.load %arg8[%c0_4, %c0_5] : memref<1x512xf32, #tpu.memory_space<vmem>>, vector<1x512xf32>
    %7 = vector.broadcast %6 : vector<1x512xf32> to vector<128x512xf32>
    %8 = arith.addf %5, %7 : vector<128x512xf32>
    %c0_6 = arith.constant 0 : index
    %c0_7 = arith.constant 0 : index
    %9 = vector.load %arg9[%c0_6, %c0_7] : memref<128x512xf32, #tpu.memory_space<vmem>>, vector<128x512xf32>
    tpu.vector_store %arg9[%c0_6, %c0_7], %8 {strides = array<i32>} : memref<128x512xf32, #tpu.memory_space<vmem>>, vector<128x512xf32>,
    return
  }
  func.func @transform_0(%arg0: i32, %arg1: i32) -> (i32, i32) {
    %c0_i32 = arith.constant 0 : i32
    %c0_i32_0 = arith.constant 0 : i32
    return %arg0, %c0_i32 : i32, i32
  }
  func.func @transform_1(%arg0: i32, %arg1: i32) -> (i32, i32) {
    %c0_i32 = arith.constant 0 : i32
    %c0_i32_0 = arith.constant 0 : i32
    %c0_i32_1 = arith.constant 0 : i32
    return %c0_i32, %c0_i32_0 : i32, i32
  }
  func.func @transform_2(%arg0: i32, %arg1: i32) -> (i32, i32) {
    %c0_i32 = arith.constant 0 : i32
    %c0_i32_0 = arith.constant 0 : i32
    %c0_i32_1 = arith.constant 0 : i32
    return %c0_i32, %c0_i32_0 : i32, i32
  }
  func.func @transform_3(%arg0: i32, %arg1: i32) -> (i32, i32) {
    %c0_i32 = arith.constant 0 : i32
    %c0_i32_0 = arith.constant 0 : i32
    %c0_i32_1 = arith.constant 0 : i32
    return %c0_i32, %c0_i32_0 : i32, i32
  }
  func.func @transform_4(%arg0: i32, %arg1: i32) -> (i32, i32) {
    %c0_i32 = arith.constant 0 : i32
    %c0_i32_0 = arith.constant 0 : i32
    %c0_i32_1 = arith.constant 0 : i32
    return %c0_i32, %c0_i32_0 : i32, i32
  }
  func.func @transform_5(%arg0: i32, %arg1: i32) -> (i32, i32) {
    %c0_i32 = arith.constant 0 : i32
    %c0_i32_0 = arith.constant 0 : i32
    return %c0_i32, %arg1 : i32, i32
  }
  func.func @transform_6(%arg0: i32, %arg1: i32) -> (i32, i32) {
    %c0_i32 = arith.constant 0 : i32
    %c0_i32_0 = arith.constant 0 : i32
    return %c0_i32, %arg1 : i32, i32
  }
  func.func @transform_7(%arg0: i32, %arg1: i32) -> (i32, i32) {
    %c0_i32 = arith.constant 0 : i32
    return %arg0, %arg1 : i32, i32
  }
}

</mosaic_0001>

<llo_original>
// kernel: tpu_custom_call.1
$region0: #{tpu_custom_call.1}
  #allocation0 [shape = 'u32[]', space=smem, size = 0x4, offset = 0x4, fixed_abs, tag = 'smem constant byte address 0x4 - core index']
  #allocation1 [shape = 'u32[144,128]{1,0:T(1,128)}', space=vmem, size = 0x12000, scoped, tag = 'internal scratch']
  #allocation2 [shape = 'bf16[128,128]{1,0:T(16,128)(2,1)}', space=vmem, size = 0x8000, scoped, tag = 'scratch operand']
  %s0 = inlined_call_operand.hbm [shape: bf16[128,256], index: 0, kind: input, shape index: {}]
  %s1 = inlined_call_operand.hbm [shape: bf16[256,128], index: 1, kind: input, shape index: {}]
  %s2 = inlined_call_operand.vmem [shape: f32[1,128], index: 2, kind: input, shape index: {}]
  %s3 = inlined_call_operand.vmem [shape: f32[1,128], index: 3, kind: input, shape index: {}]
  %s4 = inlined_call_operand.vmem [shape: f32[1,128], index: 4, kind: input, shape index: {}]
  %s5 = inlined_call_operand.hbm [shape: bf16[128,1024], index: 5, kind: input, shape index: {}]
  %s6 = inlined_call_operand.vmem [shape: f32[1,1024], index: 6, kind: input, shape index: {}]
  %s7 = inlined_call_operand.hbm [shape: f32[128,1024], index: 7, kind: output, shape index: {}]
  %s8 = sld [smem:[#allocation0]]
  $region77: #{tpu_custom_call.1} parent=0
    _
  %s10 = ssub.s32 1, %s8
  %s11 = scalar_select 0, %s10, %s8
  $region1: #{tpu_custom_call.1} parent=0
    #allocation3 [shape = 'u8[65536]{0}', space=vmem, size = 0x10000, scoped, tag = 'input window, operand 0, single buffered']
    #allocation4 [shape = 's32[2]{0}', space=sflag, size = 0x8, scoped, tag = 'scoped memory for tpu_custom_call.1']
    #allocation5 [shape = 's32[2]{0}', space=sflag, size = 0x8, scoped, tag = 'scoped memory for tpu_custom_call.1']
    #allocation6 [shape = 'u8[65536]{0}', space=vmem, size = 0x10000, scoped, tag = 'input window, operand 1, single buffered']
    #allocation7 [shape = 's32[1]{0}', space=sflag, size = 0x4, scoped, tag = 'scoped memory for tpu_custom_call.1']
    #allocation8 [shape = 'u8[262144]{0}', space=vmem, size = 0x40000, scoped, tag = 'input window, operand 5']
    #allocation9 [shape = 'u8[524288]{0}', space=vmem, size = 0x80000, scoped, tag = 'output window, operand 0']
    %12 = vsyncpa [#allocation4], 0
    %13 = vsyncpa [#allocation7], 0
    %14 = vsyncpa [#allocation5], 0
    %s15 = scalar_lea.sflag [#allocation5], 1
    %16 = vsyncpa %s15, 0
    loop: start=0, step=1, limit=4
    $region2: #{tpu_custom_call.1} parent=1 // loop_pre_header
      _
    $region3: #{tpu_custom_call.1} parent=1 // loop_header
      %s18 = sphi 0, %s22
      %p19 = scmp.ge.s32.totalorder %s18, 4
      %s25 = sphi 0, %s37
      %s26 = sphi 0, %s33
      %s27 = sphi 0, %s25
      %s28 = sphi 0, %s26
      %s29 = sphi 0, %s27
      %s30 = sphi 0, %s28
      %s40 = sphi 0, %s42
      %s43 = sphi 0, %s40
      %s44 = sphi 0, %s43
      %s60 = sphi 0, %s44
      %s64 = sphi 0, %s64
      %s66 = sphi 0, %s64
      %s67 = sphi 0, %s66
      %s81 = sphi 0, %s67
      %s85 = sphi 0, %s85
      %s87 = sphi 0, %s85
      %s88 = sphi 0, %s87
      %s102 = sphi 0, %s88
      %s106 = sphi 0, %s106
      %s108 = sphi 0, %s106
      %s109 = sphi 0, %s108
      %s123 = sphi 0, %s109
      %s127 = sphi 0, %s127
      %s129 = sphi 0, %s127
      %s130 = sphi 0, %s129
      %s144 = sphi 0, %s130
      %s150 = sphi 0, %s152
      %s153 = sphi 0, %s150
      %s154 = sphi 0, %s153
      %s170 = sphi 0, %s154
      %s176 = sphi 0, %s178
      %s179 = sphi 0, %s176
      %s180 = sphi 0, %s179
      %s196 = sphi 0, %s180
      %s204 = sphi 0, %s206
      %s207 = sphi 0, %s204
      %s208 = sphi 0, %s207
      %s224 = sphi 0, %s208
    $region4: #{tpu_custom_call.1} parent=1 // loop_header_branch
      %21 = sbr.rel (%p19) target = $region8
    $region5: #{tpu_custom_call.1} parent=1 // loop_body
      %s23 = ssub.s32 %s18, 1
      %s24 = ssub.s32 %s18, 2
      %s31 = sadd.s32 1, %s26
      %p32 = scmp.ge.s32.totalorder %s31, 2
      %s33 = scalar_select %p32, 0, %s31
      %s34 = sadd.s32 1, %s25
      %s35 = scalar_select %p32, %s34, %s25
      %p36 = scmp.ge.s32.totalorder %s35, 1
      %s37 = scalar_select %p36, 0, %s35
      %s38 = ssub.s32 %s25, %s37
      %p39 = scmp.eq.s32.totalorder %s38, 0
      %s41 = sadd.s32 %s40, 1
      %s42 = scalar_select %p39, %s40, %s41
      %p45 = pneg %p39
      %p46 = scmp.eq.s32.totalorder %s18, 1
      %p47 = por %p45, %p46
      %p48 = scmp.ne.s32.totalorder %s40, %s43
      %p49 = scmp.eq.s32.totalorder %s18, 0
      %p50 = por %p48, %p49
      %p51 = scmp.ne.s32.totalorder %s40, %s43
      %p52 = scmp.eq.s32.totalorder %s23, 1
      %p53 = por %p51, %p52
      %p54 = scmp.ne.s32.totalorder %s43, %s44
      %p55 = scmp.eq.s32.totalorder %s23, 0
      %p56 = por %p54, %p55
      %p57 = scmp.ne.s32.totalorder %s43, %s44
      %p58 = scmp.eq.s32.totalorder %s24, 1
      %p59 = por %p57, %p58
      %p61 = scmp.ne.s32.totalorder %s44, %s60
      %p62 = scmp.eq.s32.totalorder %s24, 0
      %p63 = por %p61, %p62
      %s65 = sadd.s32 %s64, 1
      %p68 = scmp.eq.s32.totalorder %s18, 1
      %p69 = scmp.ne.s32.totalorder %s64, %s66
      %p70 = scmp.eq.s32.totalorder %s18, 0
      %p71 = por %p69, %p70
      %p72 = scmp.ne.s32.totalorder %s64, %s66
      %p73 = scmp.eq.s32.totalorder %s23, 1
      %p74 = por %p72, %p73
      %p75 = scmp.ne.s32.totalorder %s66, %s67
      %p76 = scmp.eq.s32.totalorder %s23, 0
      %p77 = por %p75, %p76
      %p78 = scmp.ne.s32.totalorder %s66, %s67
      %p79 = scmp.eq.s32.totalorder %s24, 1
      %p80 = por %p78, %p79
      %p82 = scmp.ne.s32.totalorder %s67, %s81
      %p83 = scmp.eq.s32.totalorder %s24, 0
      %p84 = por %p82, %p83
      %s86 = sadd.s32 %s85, 1
      %p89 = scmp.eq.s32.totalorder %s18, 1
      %p90 = scmp.ne.s32.totalorder %s85, %s87
      %p91 = scmp.eq.s32.totalorder %s18, 0
      %p92 = por %p90, %p91
      %p93 = scmp.ne.s32.totalorder %s85, %s87
      %p94 = scmp.eq.s32.totalorder %s23, 1
      %p95 = por %p93, %p94
      %p96 = scmp.ne.s32.totalorder %s87, %s88
      %p97 = scmp.eq.s32.totalorder %s23, 0
      %p98 = por %p96, %p97
      %p99 = scmp.ne.s32.totalorder %s87, %s88
      %p100 = scmp.eq.s32.totalorder %s24, 1
      %p101 = por %p99, %p100
      %p103 = scmp.ne.s32.totalorder %s88, %s102
      %p104 = scmp.eq.s32.totalorder %s24, 0
      %p105 = por %p103, %p104
      %s107 = sadd.s32 %s106, 1
      %p110 = scmp.eq.s32.totalorder %s18, 1
      %p111 = scmp.ne.s32.totalorder %s106, %s108
      %p112 = scmp.eq.s32.totalorder %s18, 0
      %p113 = por %p111, %p112
      %p114 = scmp.ne.s32.totalorder %s106, %s108
      %p115 = scmp.eq.s32.totalorder %s23, 1
      %p116 = por %p114, %p115
      %p117 = scmp.ne.s32.totalorder %s108, %s109
      %p118 = scmp.eq.s32.totalorder %s23, 0
      %p119 = por %p117, %p118
      %p120 = scmp.ne.s32.totalorder %s108, %s109
      %p121 = scmp.eq.s32.totalorder %s24, 1
      %p122 = por %p120, %p121
      %p124 = scmp.ne.s32.totalorder %s109, %s123
      %p125 = scmp.eq.s32.totalorder %s24, 0
      %p126 = por %p124, %p125
      %s128 = sadd.s32 %s127, 1
      %p131 = scmp.eq.s32.totalorder %s18, 1
      %p132 = scmp.ne.s32.totalorder %s127, %s129
      %p133 = scmp.eq.s32.totalorder %s18, 0
      %p134 = por %p132, %p133
      %p135 = scmp.ne.s32.totalorder %s127, %s129
      %p136 = scmp.eq.s32.totalorder %s23, 1
      %p137 = por %p135, %p136
      %p138 = scmp.ne.s32.totalorder %s129, %s130
      %p139 = scmp.eq.s32.totalorder %s23, 0
      %p140 = por %p138, %p139
      %p141 = scmp.ne.s32.totalorder %s129, %s130
      %p142 = scmp.eq.s32.totalorder %s24, 1
      %p143 = por %p141, %p142
      %p145 = scmp.ne.s32.totalorder %s130, %s144
      %p146 = scmp.eq.s32.totalorder %s24, 0
      %p147 = por %p145, %p146
      %s148 = ssub.s32 %s26, %s33
      %p149 = scmp.eq.s32.totalorder %s148, 0
      %s151 = sadd.s32 %s150, 1
      %s152 = scalar_select %p149, %s150, %s151
      %p155 = pneg %p149
      %p156 = scmp.eq.s32.totalorder %s18, 1
      %p157 = por %p155, %p156
      %p158 = scmp.ne.s32.totalorder %s150, %s153
      %p159 = scmp.eq.s32.totalorder %s18, 0
      %p160 = por %p158, %p159
      %p161 = scmp.ne.s32.totalorder %s150, %s153
      %p162 = scmp.eq.s32.totalorder %s23, 1
      %p163 = por %p161, %p162
      %p164 = scmp.ne.s32.totalorder %s153, %s154
      %p165 = scmp.eq.s32.totalorder %s23, 0
      %p166 = por %p164, %p165
      %p167 = scmp.ne.s32.totalorder %s153, %s154
      %p168 = scmp.eq.s32.totalorder %s24, 1
      %p169 = por %p167, %p168
      %p171 = scmp.ne.s32.totalorder %s154, %s170
      %p172 = scmp.eq.s32.totalorder %s24, 0
      %p173 = por %p171, %p172
      %s174 = ssub.s32 %s26, %s33
      %p175 = scmp.eq.s32.totalorder %s174, 0
      %s177 = sadd.s32 %s176, 1
      %s178 = scalar_select %p175, %s176, %s177
      %p181 = pneg %p175
      %p182 = scmp.eq.s32.totalorder %s18, 1
      %p183 = por %p181, %p182
      %p184 = scmp.ne.s32.totalorder %s176, %s179
      %p185 = scmp.eq.s32.totalorder %s18, 0
      %p186 = por %p184, %p185
      %p187 = scmp.ne.s32.totalorder %s176, %s179
      %p188 = scmp.eq.s32.totalorder %s23, 1
      %p189 = por %p187, %p188
      %p190 = scmp.ne.s32.totalorder %s179, %s180
      %p191 = scmp.eq.s32.totalorder %s23, 0
      %p192 = por %p190, %p191
      %p193 = scmp.ne.s32.totalorder %s179, %s180
      %p194 = scmp.eq.s32.totalorder %s24, 1
      %p195 = por %p193, %p194
      %p197 = scmp.ne.s32.totalorder %s180, %s196
      %p198 = scmp.eq.s32.totalorder %s24, 0
      %p199 = por %p197, %p198
      %s200 = ssub.s32 %s25, %s37
      %s201 = ssub.s32 %s26, %s33
      %s202 = sor.u32 %s200, %s201
      %p203 = scmp.eq.s32.totalorder %s202, 0
      %s205 = sadd.s32 %s204, 1
      %s206 = scalar_select %p203, %s204, %s205
      %p209 = pneg %p203
      %p210 = scmp.eq.s32.totalorder %s18, 1
      %p211 = por %p209, %p210
      %p212 = scmp.ne.s32.totalorder %s204, %s207
      %p213 = scmp.eq.s32.totalorder %s18, 0
      %p214 = por %p212, %p213
      %p215 = scmp.ne.s32.totalorder %s204, %s207
      %p216 = scmp.eq.s32.totalorder %s23, 1
      %p217 = por %p215, %p216
      %p218 = scmp.ne.s32.totalorder %s207, %s208
      %p219 = scmp.eq.s32.totalorder %s23, 0
      %p220 = por %p218, %p219
      %p221 = scmp.ne.s32.totalorder %s207, %s208
      %p222 = scmp.eq.s32.totalorder %s24, 1
      %p223 = por %p221, %p222
      %p225 = scmp.ne.s32.totalorder %s208, %s224
      %p226 = scmp.eq.s32.totalorder %s24, 0
      %p227 = por %p225, %p226
      %p228 = scmp.le.s32.totalorder 1, %s18
      %p229 = scmp.lt.s32.totalorder %s18, 3
      %p230 = pnand %p228, %p229
      %p231 = pneg %p230
      // Predicated region
      $region9: #{tpu_custom_call.1} parent=5 // pred_check
        _
      $region10: #{tpu_custom_call.1} parent=5 // pred_check_branch
        %233 = sbr.rel (%p230) target = $region12
      $region11: #{tpu_custom_call.1} parent=5 // pred_region
        %s234 = ssub.s32 %s18, 1
        // Predicated region
        $region13: #{tpu_custom_call.1} parent=11 // pred_check
          %p235 = pneg %p56
        $region14: #{tpu_custom_call.1} parent=11 // pred_check_branch
          %237 = sbr.rel (%p235) target = $region16
        $region15: #{tpu_custom_call.1} parent=11 // pred_region
          %s238 = smul.u32 16, %s27
          %s240 = ssub.s32 2048, 2048
          %241 = vsyncadd [#allocation4], %s240
          %s242 = smul.addr %s238, 2
          %s243 = smul.addr %s242, 64
          %s244 = scalar_lea.hbm %s0, %s243
          %s245 = sshll.u32 [#allocation3], 4
          %s246 = int_to_ptr.vmem [resolvable:$true] %s245
          %251 = dma.hbm_to_vmem [thread:$0]  %s244, 2048, %s246, [#allocation4], 128, 128, 8
        $region16: #{tpu_custom_call.1} parent=11 // pred_fallthru
          _
        // Predicated region
        $region17: #{tpu_custom_call.1} parent=11 // pred_check
          %p252 = pneg %p77
        $region18: #{tpu_custom_call.1} parent=11 // pred_check_branch
          %254 = sbr.rel (%p252) target = $region20
        $region19: #{tpu_custom_call.1} parent=11 // pred_region
          %s256 = ssub.s32 2048, 2048
          %257 = vsyncadd [#allocation7], %s256
          %s258 = sshll.u32 [#allocation6], 4
          %s259 = int_to_ptr.vmem [resolvable:$true] %s258
          %264 = dma.hbm_to_vmem [thread:$0]  %s1, 2048, %s259, [#allocation7], 64, 64, 4
        $region20: #{tpu_custom_call.1} parent=11 // pred_fallthru
          _
        // Predicated region
        $region21: #{tpu_custom_call.1} parent=11 // pred_check
          %p265 = pneg %p98
        $region22: #{tpu_custom_call.1} parent=11 // pred_check_branch
          %267 = sbr.rel (%p265) target = $region24
        $region23: #{tpu_custom_call.1} parent=11 // pred_region
          _
        $region24: #{tpu_custom_call.1} parent=11 // pred_fallthru
          _
        // Predicated region
        $region25: #{tpu_custom_call.1} parent=11 // pred_check
          %p268 = pneg %p119
        $region26: #{tpu_custom_call.1} parent=11 // pred_check_branch
          %270 = sbr.rel (%p268) target = $region28
        $region27: #{tpu_custom_call.1} parent=11 // pred_region
          _
        $region28: #{tpu_custom_call.1} parent=11 // pred_fallthru
          _
        // Predicated region
        $region29: #{tpu_custom_call.1} parent=11 // pred_check
          %p271 = pneg %p140
        $region30: #{tpu_custom_call.1} parent=11 // pred_check_branch
          %273 = sbr.rel (%p271) target = $region32
        $region31: #{tpu_custom_call.1} parent=11 // pred_region
          _
        $region32: #{tpu_custom_call.1} parent=11 // pred_fallthru
          _
      $region12: #{tpu_custom_call.1} parent=5 // pred_fallthru
        _
      %p274 = scmp.lt.s32.totalorder %s18, 2
      // Predicated region
      $region33: #{tpu_custom_call.1} parent=5 // pred_check
        %p275 = pneg %p274
      $region34: #{tpu_custom_call.1} parent=5 // pred_check_branch
        %277 = sbr.rel (%p275) target = $region36
      $region35: #{tpu_custom_call.1} parent=5 // pred_region
        // Predicated region
        $region37: #{tpu_custom_call.1} parent=35 // pred_check
          %p278 = pneg %p160
        $region38: #{tpu_custom_call.1} parent=35 // pred_check_branch
          %280 = sbr.rel (%p278) target = $region40
        $region39: #{tpu_custom_call.1} parent=35 // pred_region
          %s281 = sand.u32 %s18, 1
          %s282 = scalar_lea.sflag [#allocation4], %s281
          %s283 = sand.u32 %s150, 1
          %s284 = smul.addr %s283, 256
          %s285 = scalar_lea.vmem [#allocation8], %s284
          %s286 = smul.u32 4, %s26
          %s288 = ssub.s32 4096, 4096
          %289 = vsyncadd %s282, %s288
          %s290 = smul.addr %s286, 64
          %s291 = scalar_lea.hbm %s5, %s290
          %s292 = sshll.u32 %s285, 4
          %s293 = int_to_ptr.vmem [resolvable:$true] %s292
          %298 = dma.hbm_to_vmem [thread:$0]  %s291, 4096, %s293, %s282, 512, 256, 16
        $region40: #{tpu_custom_call.1} parent=35 // pred_fallthru
          _
        // Predicated region
        $region41: #{tpu_custom_call.1} parent=35 // pred_check
          %p299 = pneg %p186
        $region42: #{tpu_custom_call.1} parent=35 // pred_check_branch
          %301 = sbr.rel (%p299) target = $region44
        $region43: #{tpu_custom_call.1} parent=35 // pred_region
          %s302 = smul.u32 4, %s26
          %p303 = scmp.lt.s32.totalorder %s302, 7
          %s304 = scalar_select %p303, %s302, 7
          %s305 = scalar_lea.vmem %s6, %s304
          %s306 = smul.u32 4, %s26
        $region44: #{tpu_custom_call.1} parent=35 // pred_fallthru
          _
      $region36: #{tpu_custom_call.1} parent=5 // pred_fallthru
        _
      %p307 = scmp.le.s32.totalorder 1, %s18
      %p308 = scmp.lt.s32.totalorder %s18, 3
      %p309 = pnand %p307, %p308
      %p310 = pneg %p309
      // Predicated region
      $region45: #{tpu_custom_call.1} parent=5 // pred_check
        _
      $region46: #{tpu_custom_call.1} parent=5 // pred_check_branch
        %312 = sbr.rel (%p309) target = $region48
      $region47: #{tpu_custom_call.1} parent=5 // pred_region
        %s313 = ssub.s32 %s18, 1
        // Predicated region
        $region49: #{tpu_custom_call.1} parent=47 // pred_check
          %p314 = pneg %p56
        $region50: #{tpu_custom_call.1} parent=47 // pred_check_branch
          %316 = sbr.rel (%p314) target = $region52
        $region51: #{tpu_custom_call.1} parent=47 // pred_region
          %317 = dma.done [#allocation4], 2048
        $region52: #{tpu_custom_call.1} parent=47 // pred_fallthru
          _
        // Predicated region
        $region53: #{tpu_custom_call.1} parent=47 // pred_check
          %p318 = pneg %p77
        $region54: #{tpu_custom_call.1} parent=47 // pred_check_branch
          %320 = sbr.rel (%p318) target = $region56
        $region55: #{tpu_custom_call.1} parent=47 // pred_region
          %321 = dma.done [#allocation7], 2048
        $region56: #{tpu_custom_call.1} parent=47 // pred_fallthru
          _
        %s322 = sand.u32 %s23, 1
        %s323 = scalar_lea.sflag [#allocation4], %s322
        %s324 = sand.u32 %s153, 1
        %s325 = smul.addr %s324, 256
        %s326 = scalar_lea.vmem [#allocation8], %s325
        // Predicated region
        $region57: #{tpu_custom_call.1} parent=47 // pred_check
          %p327 = pneg %p166
        $region58: #{tpu_custom_call.1} parent=47 // pred_check_branch
          %329 = sbr.rel (%p327) target = $region60
        $region59: #{tpu_custom_call.1} parent=47 // pred_region
          %330 = dma.done %s323, 4096
        $region60: #{tpu_custom_call.1} parent=47 // pred_fallthru
          _
        %p331 = pneg %p56
        %p332 = pneg %p53
        %p333 = pneg %p77
        %p334 = pneg %p74
        %p335 = pneg %p98
        %p336 = pneg %p95
        %p337 = pneg %p119
        %p338 = pneg %p116
        %p339 = pneg %p140
        %p340 = pneg %p137
        %s341 = sand.u32 %s23, 1
        %s342 = scalar_lea.sflag [#allocation4], %s341
        %s343 = sand.u32 %s153, 1
        %s344 = smul.addr %s343, 256
        %s345 = scalar_lea.vmem [#allocation8], %s344
        %p346 = pneg %p166
        %p347 = pneg %p163
        %s348 = smul.u32 4, %s28
        %p349 = scmp.lt.s32.totalorder %s348, 7
        %s350 = scalar_select %p349, %s348, 7
        %s351 = scalar_lea.vmem %s6, %s350
        %p352 = pneg %p192
        %p353 = pneg %p189
        %p354 = pneg %p220
        %p355 = pneg %p217
        %s356 = sand.u32 %s207, 1
        %s357 = scalar_lea.sflag [#allocation5], %s356
        %s358 = sand.u32 %s207, 1
        %s359 = smul.addr %s358, 512
        %s360 = scalar_lea.vmem [#allocation9], %s359
        %s361 = smul.u32 16, %s27
        %s362 = smul.u32 4, %s28
        %s363 = smul.u32 4, %s28
        %p364 = scmp.lt.s32.totalorder %s363, 7
        %s365 = scalar_select %p364, %s363, 7
        %s366 = scalar_lea.vmem %s6, %s365
        %s367 = smul.u32 4, %s28
        %s368 = smul.u32 16, %s27
        %s369 = smul.u32 4, %s28
        %p371 = scmp.eq.s32.totalorder %s28, 0
        // Predicated region
        $region61: #{tpu_custom_call.1} parent=47 // pred_check
          %p372 = pneg %p371
        $region62: #{tpu_custom_call.1} parent=47 // pred_check_branch
          %374 = sbr.rel (%p372) target = $region64
        $region63: #{tpu_custom_call.1} parent=47 // pred_region
          %v375 = vld [vmem:[#allocation3] sm:$0xff]
          %v376 = vld [vmem:[#allocation3 + $0x8] sm:$0xff]
          %v377 = vld [vmem:[#allocation3 + $0x10] sm:$0xff]
          %v378 = vld [vmem:[#allocation3 + $0x18] sm:$0xff]
          %v379 = vld [vmem:[#allocation3 + $0x20] sm:$0xff]
          %v380 = vld [vmem:[#allocation3 + $0x28] sm:$0xff]
          %v381 = vld [vmem:[#allocation3 + $0x30] sm:$0xff]
          %v382 = vld [vmem:[#allocation3 + $0x38] sm:$0xff]
          %v383 = vld [vmem:[#allocation3 + $0x40] sm:$0xff]
          %v384 = vld [vmem:[#allocation3 + $0x48] sm:$0xff]
          %v385 = vld [vmem:[#allocation3 + $0x50] sm:$0xff]
          %v386 = vld [vmem:[#allocation3 + $0x58] sm:$0xff]
          %v387 = vld [vmem:[#allocation3 + $0x60] sm:$0xff]
          %v388 = vld [vmem:[#allocation3 + $0x68] sm:$0xff]
          %v389 = vld [vmem:[#allocation3 + $0x70] sm:$0xff]
          %v390 = vld [vmem:[#allocation3 + $0x78] sm:$0xff]
          %v391 = vld [vmem:[#allocation6] sm:$0xf]
          %v392 = vld [vmem:[#allocation6 + $0x4] sm:$0xf]
          %v393 = vld [vmem:[#allocation6 + $0x8] sm:$0xf]
          %v394 = vld [vmem:[#allocation6 + $0xc] sm:$0xf]
          %v395 = vld [vmem:[#allocation6 + $0x10] sm:$0xf]
          %v396 = vld [vmem:[#allocation6 + $0x14] sm:$0xf]
          %v397 = vld [vmem:[#allocation6 + $0x18] sm:$0xf]
          %v398 = vld [vmem:[#allocation6 + $0x1c] sm:$0xf]
          %v399 = vld [vmem:[#allocation6 + $0x20] sm:$0xf]
          %v400 = vld [vmem:[#allocation6 + $0x24] sm:$0xf]
          %v401 = vld [vmem:[#allocation6 + $0x28] sm:$0xf]
          %v402 = vld [vmem:[#allocation6 + $0x2c] sm:$0xf]
          %v403 = vld [vmem:[#allocation6 + $0x30] sm:$0xf]
          %v404 = vld [vmem:[#allocation6 + $0x34] sm:$0xf]
          %v405 = vld [vmem:[#allocation6 + $0x38] sm:$0xf]
          %v406 = vld [vmem:[#allocation6 + $0x3c] sm:$0xf]
          %v407 = vld [vmem:[#allocation6 + $0x40] sm:$0xf]
          %v408 = vld [vmem:[#allocation6 + $0x44] sm:$0xf]
          %v409 = vld [vmem:[#allocation6 + $0x48] sm:$0xf]
          %v410 = vld [vmem:[#allocation6 + $0x4c] sm:$0xf]
          %v411 = vld [vmem:[#allocation6 + $0x50] sm:$0xf]
          %v412 = vld [vmem:[#allocation6 + $0x54] sm:$0xf]
          %v413 = vld [vmem:[#allocation6 + $0x58] sm:$0xf]
          %v414 = vld [vmem:[#allocation6 + $0x5c] sm:$0xf]
          %v415 = vld [vmem:[#allocation6 + $0x60] sm:$0xf]
          %v416 = vld [vmem:[#allocation6 + $0x64] sm:$0xf]
          %v417 = vld [vmem:[#allocation6 + $0x68] sm:$0xf]
          %v418 = vld [vmem:[#allocation6 + $0x6c] sm:$0xf]
          %v419 = vld [vmem:[#allocation6 + $0x70] sm:$0xf]
          %v420 = vld [vmem:[#allocation6 + $0x74] sm:$0xf]
          %v421 = vld [vmem:[#allocation6 + $0x78] sm:$0xf]
          %v422 = vld [vmem:[#allocation6 + $0x7c] sm:$0xf]
          %v423 = vld [vmem:[%s2] sm:$0x1]
          %v425 = vlaneseq
          %v426 = vshrl.u32 %v425, 7
          %v427 = vsub.s32 0, %v426
          %v428 = vrot.slane %v423, %v427
          %v446 = vunpack.c.l.b16 %v375
          %v447 = vunpack.c.h.b16 %v375
          %v448 = vunpack.c.l.b16 %v376
          %v449 = vunpack.c.h.b16 %v376
          %v450 = vunpack.c.l.b16 %v377
          %v451 = vunpack.c.h.b16 %v377
          %v452 = vunpack.c.l.b16 %v378
          %v453 = vunpack.c.h.b16 %v378
          %v454 = vunpack.c.l.b16 %v379
          %v455 = vunpack.c.h.b16 %v379
          %v456 = vunpack.c.l.b16 %v380
          %v457 = vunpack.c.h.b16 %v380
          %v458 = vunpack.c.l.b16 %v381
          %v459 = vunpack.c.h.b16 %v381
          %v460 = vunpack.c.l.b16 %v382
          %v461 = vunpack.c.h.b16 %v382
          %v462 = vunpack.c.l.b16 %v383
          %v463 = vunpack.c.h.b16 %v383
          %v464 = vunpack.c.l.b16 %v384
          %v465 = vunpack.c.h.b16 %v384
          %v466 = vunpack.c.l.b16 %v385
          %v467 = vunpack.c.h.b16 %v385
          %v468 = vunpack.c.l.b16 %v386
          %v469 = vunpack.c.h.b16 %v386
          %v470 = vunpack.c.l.b16 %v387
          %v471 = vunpack.c.h.b16 %v387
          %v472 = vunpack.c.l.b16 %v388
          %v473 = vunpack.c.h.b16 %v388
          %v474 = vunpack.c.l.b16 %v389
          %v475 = vunpack.c.h.b16 %v389
          %v476 = vunpack.c.l.b16 %v390
          %v477 = vunpack.c.h.b16 %v390
          %v478 = vpack.c.b16 %v448, %v446
          %v479 = vpack.c.b16 %v449, %v447
          %v480 = vpack.c.b16 %v452, %v450
          %v481 = vpack.c.b16 %v453, %v451
          %v482 = vpack.c.b16 %v456, %v454
          %v483 = vpack.c.b16 %v457, %v455
          %v484 = vpack.c.b16 %v460, %v458
          %v485 = vpack.c.b16 %v461, %v459
          %v486 = vpack.c.b16 %v464, %v462
          %v487 = vpack.c.b16 %v465, %v463
          %v488 = vpack.c.b16 %v468, %v466
          %v489 = vpack.c.b16 %v469, %v467
          %v490 = vpack.c.b16 %v472, %v470
          %v491 = vpack.c.b16 %v473, %v471
          %v492 = vpack.c.b16 %v476, %v474
          %v493 = vpack.c.b16 %v477, %v475
          %v542 = vunpack.c.l.b16 %v391
          %v543 = vunpack.c.l.b16 %v392
          %v544 = vunpack.c.l.b16 %v393
          %v545 = vunpack.c.l.b16 %v394
          %v546 = vunpack.c.l.b16 %v395
          %v547 = vunpack.c.l.b16 %v396
          %v548 = vunpack.c.l.b16 %v397
          %v549 = vunpack.c.l.b16 %v398
          %v550 = vunpack.c.l.b16 %v399
          %v551 = vunpack.c.l.b16 %v400
          %v552 = vunpack.c.l.b16 %v401
          %v553 = vunpack.c.l.b16 %v402
          %v554 = vunpack.c.l.b16 %v403
          %v555 = vunpack.c.l.b16 %v404
          %v556 = vunpack.c.l.b16 %v405
          %v557 = vunpack.c.l.b16 %v406
          %v558 = vunpack.c.l.b16 %v407
          %v559 = vunpack.c.l.b16 %v408
          %v560 = vunpack.c.l.b16 %v409
          %v561 = vunpack.c.l.b16 %v410
          %v562 = vunpack.c.l.b16 %v411
          %v563 = vunpack.c.l.b16 %v412
          %v564 = vunpack.c.l.b16 %v413
          %v565 = vunpack.c.l.b16 %v414
          %v566 = vunpack.c.l.b16 %v415
          %v567 = vunpack.c.l.b16 %v416
          %v568 = vunpack.c.l.b16 %v417
          %v569 = vunpack.c.l.b16 %v418
          %v570 = vunpack.c.l.b16 %v419
          %v571 = vunpack.c.l.b16 %v420
          %v572 = vunpack.c.l.b16 %v421
          %v573 = vunpack.c.l.b16 %v422
          %v574 = vpack.c.b16 %v543, %v542
          %v575 = vpack.c.b16 %v545, %v544
          %v576 = vpack.c.b16 %v547, %v546
          %v577 = vpack.c.b16 %v549, %v548
          %v578 = vpack.c.b16 %v551, %v550
          %v579 = vpack.c.b16 %v553, %v552
          %v580 = vpack.c.b16 %v555, %v554
          %v581 = vpack.c.b16 %v557, %v556
          %v582 = vpack.c.b16 %v559, %v558
          %v583 = vpack.c.b16 %v561, %v560
          %v584 = vpack.c.b16 %v563, %v562
          %v585 = vpack.c.b16 %v565, %v564
          %v586 = vpack.c.b16 %v567, %v566
          %v587 = vpack.c.b16 %v569, %v568
          %v588 = vpack.c.b16 %v571, %v570
          %v589 = vpack.c.b16 %v573, %v572
          %606 = vmatprep.subr.bf16.mxu0 0
          %607 = vmatpush1.bf16.msra.mxu0 %v574
          %608 = vmatprep.subr.bf16.mxu0 0
          %609 = vmatpush1.bf16.msra.mxu0 %v575
          %610 = vmatprep.subr.bf16.mxu0 0
          %611 = vmatpush1.bf16.msra.mxu0 %v576
          %612 = vmatprep.subr.bf16.mxu0 0
          %613 = vmatpush1.bf16.msra.mxu0 %v577
          %614 = vmatprep.subr.bf16.mxu0 0
          %615 = vmatpush1.bf16.msra.mxu0 %v578
          %616 = vmatprep.subr.bf16.mxu0 0
          %617 = vmatpush1.bf16.msra.mxu0 %v579
          %618 = vmatprep.subr.bf16.mxu0 0
          %619 = vmatpush1.bf16.msra.mxu0 %v580
          %620 = vmatprep.subr.bf16.mxu0 0
          %621 = vmatpush1.bf16.msra.mxu0 %v581
          %622 = vmatprep.subr.bf16.mxu0 0
          %623 = vmatpush1.bf16.msra.mxu0 %v582
          %624 = vmatprep.subr.bf16.mxu0 0
          %625 = vmatpush1.bf16.msra.mxu0 %v583
          %626 = vmatprep.subr.bf16.mxu0 0
          %627 = vmatpush1.bf16.msra.mxu0 %v584
          %628 = vmatprep.subr.bf16.mxu0 0
          %629 = vmatpush1.bf16.msra.mxu0 %v585
          %630 = vmatprep.subr.bf16.mxu0 0
          %631 = vmatpush1.bf16.msra.mxu0 %v586
          %632 = vmatprep.subr.bf16.mxu0 0
          %633 = vmatpush1.bf16.msra.mxu0 %v587
          %634 = vmatprep.subr.bf16.mxu0 0
          %635 = vmatpush1.bf16.msra.mxu0 %v588
          %636 = vmatprep.subr.bf16.mxu0 0
          %637 = vmatpush1.bf16.msra.mxu0 %v589
          %638 = vmatprep.mubr.bf16.mxu0 %v479
          %639 = vmatmul.mubr.bf16.gmra.mrb[0].mxu0 %v478
          %v640 = vpop.f32.mrb[0].mxu0
          %v641 = vadd.f32 %v428, %v640
          %v642 = vpop.f32.mrb[0].mxu0
          %v643 = vpop.f32.mrb[0].mxu0
          %v644 = vadd.f32 %v428, %v643
          %v645 = vpop.f32.mrb[0].mxu0
          %646 = vmatprep.mubr.bf16.mxu0 %v481
          %647 = vmatmul.mubr.bf16.gmra.mrb[0].mxu0 %v480
          %v648 = vpop.f32.mrb[0].mxu0
          %v649 = vadd.f32 %v428, %v648
          %v650 = vpop.f32.mrb[0].mxu0
          %v651 = vpop.f32.mrb[0].mxu0
          %v652 = vadd.f32 %v428, %v651
          %v653 = vpop.f32.mrb[0].mxu0
          %654 = vmatprep.mubr.bf16.mxu0 %v483
          %655 = vmatmul.mubr.bf16.gmra.mrb[0].mxu0 %v482
          %v656 = vpop.f32.mrb[0].mxu0
          %v657 = vadd.f32 %v428, %v656
          %v658 = vpop.f32.mrb[0].mxu0
          %v659 = vpop.f32.mrb[0].mxu0
          %v660 = vadd.f32 %v428, %v659
          %v661 = vpop.f32.mrb[0].mxu0
          %662 = vmatprep.mubr.bf16.mxu0 %v485
          %663 = vmatmul.mubr.bf16.gmra.mrb[0].mxu0 %v484
          %v664 = vpop.f32.mrb[0].mxu0
          %v665 = vadd.f32 %v428, %v664
          %v666 = vpop.f32.mrb[0].mxu0
          %v667 = vpop.f32.mrb[0].mxu0
          %v668 = vadd.f32 %v428, %v667
          %v669 = vpop.f32.mrb[0].mxu0
          %670 = vmatprep.mubr.bf16.mxu0 %v487
          %671 = vmatmul.mubr.bf16.gmra.mrb[0].mxu0 %v486
          %v672 = vpop.f32.mrb[0].mxu0
          %v673 = vadd.f32 %v428, %v672
          %v674 = vpop.f32.mrb[0].mxu0
          %v675 = vpop.f32.mrb[0].mxu0
          %v676 = vadd.f32 %v428, %v675
          %v677 = vpop.f32.mrb[0].mxu0
          %678 = vmatprep.mubr.bf16.mxu0 %v489
          %679 = vmatmul.mubr.bf16.gmra.mrb[0].mxu0 %v488
          %v680 = vpop.f32.mrb[0].mxu0
          %v681 = vadd.f32 %v428, %v680
          %v682 = vpop.f32.mrb[0].mxu0
          %v683 = vpop.f32.mrb[0].mxu0
          %v684 = vadd.f32 %v428, %v683
          %v685 = vpop.f32.mrb[0].mxu0
          %686 = vmatprep.mubr.bf16.mxu0 %v491
          %687 = vmatmul.mubr.bf16.gmra.mrb[0].mxu0 %v490
          %v688 = vpop.f32.mrb[0].mxu0
          %v689 = vadd.f32 %v428, %v688
          %v690 = vpop.f32.mrb[0].mxu0
          %v691 = vpop.f32.mrb[0].mxu0
          %v692 = vadd.f32 %v428, %v691
          %v693 = vpop.f32.mrb[0].mxu0
          %694 = vmatprep.mubr.bf16.mxu0 %v493
          %695 = vmatmul.mubr.bf16.gmra.mrb[0].mxu0 %v492
          %v696 = vpop.f32.mrb[0].mxu0
          %v697 = vadd.f32 %v428, %v696
          %v698 = vpop.f32.mrb[0].mxu0
          %v699 = vpop.f32.mrb[0].mxu0
          %v700 = vadd.f32 %v428, %v699
          %v701 = vpop.f32.mrb[0].mxu0
          %702 = vdwg.mxu0
          %v703 = vmax.f32 %v641, 0.0
          %v704 = vmax.f32 %v644, 0.0
          %v705 = vmax.f32 %v649, 0.0
          %v706 = vmax.f32 %v652, 0.0
          %v707 = vmax.f32 %v657, 0.0
          %v708 = vmax.f32 %v660, 0.0
          %v709 = vmax.f32 %v665, 0.0
          %v710 = vmax.f32 %v668, 0.0
          %v711 = vmax.f32 %v673, 0.0
          %v712 = vmax.f32 %v676, 0.0
          %v713 = vmax.f32 %v681, 0.0
          %v714 = vmax.f32 %v684, 0.0
          %v715 = vmax.f32 %v689, 0.0
          %v716 = vmax.f32 %v692, 0.0
          %v717 = vmax.f32 %v697, 0.0
          %v718 = vmax.f32 %v700, 0.0
          %719 = vadd.xlane.f32.xlu0 %v703
          %v720 = vpop.xlane.xlu0 %719
          %721 = vadd.xlane.f32.xlu0 %v704
          %v722 = vpop.xlane.xlu0 %721
          %723 = vadd.xlane.f32.xlu0 %v705
          %v724 = vpop.xlane.xlu0 %723
          %725 = vadd.xlane.f32.xlu0 %v706
          %v726 = vpop.xlane.xlu0 %725
          %727 = vadd.xlane.f32.xlu0 %v707
          %v728 = vpop.xlane.xlu0 %727
          %729 = vadd.xlane.f32.xlu0 %v708
          %v730 = vpop.xlane.xlu0 %729
          %731 = vadd.xlane.f32.xlu0 %v709
          %v732 = vpop.xlane.xlu0 %731
          %733 = vadd.xlane.f32.xlu0 %v710
          %v734 = vpop.xlane.xlu0 %733
          %735 = vadd.xlane.f32.xlu0 %v711
          %v736 = vpop.xlane.xlu0 %735
          %737 = vadd.xlane.f32.xlu0 %v712
          %v738 = vpop.xlane.xlu0 %737
          %739 = vadd.xlane.f32.xlu0 %v713
          %v740 = vpop.xlane.xlu0 %739
          %741 = vadd.xlane.f32.xlu0 %v714
          %v742 = vpop.xlane.xlu0 %741
          %743 = vadd.xlane.f32.xlu0 %v715
          %v744 = vpop.xlane.xlu0 %743
          %745 = vadd.xlane.f32.xlu0 %v716
          %v746 = vpop.xlane.xlu0 %745
          %747 = vadd.xlane.f32.xlu0 %v717
          %v748 = vpop.xlane.xlu0 %747
          %749 = vadd.xlane.f32.xlu0 %v718
          %v750 = vpop.xlane.xlu0 %749
          %v751 = vrcp.pop 128.0
          %v752 = vmul.f32 %v720, %v751
          %v753 = vmul.f32 %v722, %v751
          %v754 = vmul.f32 %v724, %v751
          %v755 = vmul.f32 %v726, %v751
          %v756 = vmul.f32 %v728, %v751
          %v757 = vmul.f32 %v730, %v751
          %v758 = vmul.f32 %v732, %v751
          %v759 = vmul.f32 %v734, %v751
          %v760 = vmul.f32 %v736, %v751
          %v761 = vmul.f32 %v738, %v751
          %v762 = vmul.f32 %v740, %v751
          %v763 = vmul.f32 %v742, %v751
          %v764 = vmul.f32 %v744, %v751
          %v765 = vmul.f32 %v746, %v751
          %v766 = vmul.f32 %v748, %v751
          %v767 = vmul.f32 %v750, %v751
          %v768 = vsub.f32 %v703, %v752
          %v769 = vsub.f32 %v704, %v753
          %v770 = vsub.f32 %v705, %v754
          %v771 = vsub.f32 %v706, %v755
          %v772 = vsub.f32 %v707, %v756
          %v773 = vsub.f32 %v708, %v757
          %v774 = vsub.f32 %v709, %v758
          %v775 = vsub.f32 %v710, %v759
          %v776 = vsub.f32 %v711, %v760
          %v777 = vsub.f32 %v712, %v761
          %v778 = vsub.f32 %v713, %v762
          %v779 = vsub.f32 %v714, %v763
          %v780 = vsub.f32 %v715, %v764
          %v781 = vsub.f32 %v716, %v765
          %v782 = vsub.f32 %v717, %v766
          %v783 = vsub.f32 %v718, %v767
          %v784 = vmul.f32 %v768, %v768
          %v785 = vmul.f32 %v769, %v769
          %v786 = vmul.f32 %v770, %v770
          %v787 = vmul.f32 %v771, %v771
          %v788 = vmul.f32 %v772, %v772
          %v789 = vmul.f32 %v773, %v773
          %v790 = vmul.f32 %v774, %v774
          %v791 = vmul.f32 %v775, %v775
          %v792 = vmul.f32 %v776, %v776
          %v793 = vmul.f32 %v777, %v777
          %v794 = vmul.f32 %v778, %v778
          %v795 = vmul.f32 %v779, %v779
          %v796 = vmul.f32 %v780, %v780
          %v797 = vmul.f32 %v781, %v781
          %v798 = vmul.f32 %v782, %v782
          %v799 = vmul.f32 %v783, %v783
          %800 = vadd.xlane.f32.xlu0 %v784
          %v801 = vpop.xlane.xlu0 %800
          %802 = vadd.xlane.f32.xlu0 %v785
          %v803 = vpop.xlane.xlu0 %802
          %804 = vadd.xlane.f32.xlu0 %v786
          %v805 = vpop.xlane.xlu0 %804
          %806 = vadd.xlane.f32.xlu0 %v787
          %v807 = vpop.xlane.xlu0 %806
          %808 = vadd.xlane.f32.xlu0 %v788
          %v809 = vpop.xlane.xlu0 %808
          %810 = vadd.xlane.f32.xlu0 %v789
          %v811 = vpop.xlane.xlu0 %810
          %812 = vadd.xlane.f32.xlu0 %v790
          %v813 = vpop.xlane.xlu0 %812
          %814 = vadd.xlane.f32.xlu0 %v791
          %v815 = vpop.xlane.xlu0 %814
          %816 = vadd.xlane.f32.xlu0 %v792
          %v817 = vpop.xlane.xlu0 %816
          %818 = vadd.xlane.f32.xlu0 %v793
          %v819 = vpop.xlane.xlu0 %818
          %820 = vadd.xlane.f32.xlu0 %v794
          %v821 = vpop.xlane.xlu0 %820
          %822 = vadd.xlane.f32.xlu0 %v795
          %v823 = vpop.xlane.xlu0 %822
          %824 = vadd.xlane.f32.xlu0 %v796
          %v825 = vpop.xlane.xlu0 %824
          %826 = vadd.xlane.f32.xlu0 %v797
          %v827 = vpop.xlane.xlu0 %826
          %828 = vadd.xlane.f32.xlu0 %v798
          %v829 = vpop.xlane.xlu0 %828
          %830 = vadd.xlane.f32.xlu0 %v799
          %v831 = vpop.xlane.xlu0 %830
          %v832 = vmul.f32 %v801, %v751
          %v833 = vmul.f32 %v803, %v751
          %v834 = vmul.f32 %v805, %v751
          %v835 = vmul.f32 %v807, %v751
          %v836 = vmul.f32 %v809, %v751
          %v837 = vmul.f32 %v811, %v751
          %v838 = vmul.f32 %v813, %v751
          %v839 = vmul.f32 %v815, %v751
          %v840 = vmul.f32 %v817, %v751
          %v841 = vmul.f32 %v819, %v751
          %v842 = vmul.f32 %v821, %v751
          %v843 = vmul.f32 %v823, %v751
          %v844 = vmul.f32 %v825, %v751
          %v845 = vmul.f32 %v827, %v751
          %v846 = vmul.f32 %v829, %v751
          %v847 = vmul.f32 %v831, %v751
          %v848 = vadd.f32 %v832, 1e-05
          %v849 = vadd.f32 %v833, 1e-05
          %v850 = vadd.f32 %v834, 1e-05
          %v851 = vadd.f32 %v835, 1e-05
          %v852 = vadd.f32 %v836, 1e-05
          %v853 = vadd.f32 %v837, 1e-05
          %v854 = vadd.f32 %v838, 1e-05
          %v855 = vadd.f32 %v839, 1e-05
          %v856 = vadd.f32 %v840, 1e-05
          %v857 = vadd.f32 %v841, 1e-05
          %v858 = vadd.f32 %v842, 1e-05
          %v859 = vadd.f32 %v843, 1e-05
          %v860 = vadd.f32 %v844, 1e-05
          %v861 = vadd.f32 %v845, 1e-05
          %v862 = vadd.f32 %v846, 1e-05
          %v863 = vadd.f32 %v847, 1e-05
          %v864 = vrsqrt.pop %v848
          %v865 = vrsqrt.pop %v849
          %v866 = vrsqrt.pop %v850
          %v867 = vrsqrt.pop %v851
          %v868 = vrsqrt.pop %v852
          %v869 = vrsqrt.pop %v853
          %v870 = vrsqrt.pop %v854
          %v871 = vrsqrt.pop %v855
          %v872 = vrsqrt.pop %v856
          %v873 = vrsqrt.pop %v857
          %v874 = vrsqrt.pop %v858
          %v875 = vrsqrt.pop %v859
          %v876 = vrsqrt.pop %v860
          %v877 = vrsqrt.pop %v861
          %v878 = vrsqrt.pop %v862
          %v879 = vrsqrt.pop %v863
          %v880 = vmul.f32 %v768, %v864
          %v881 = vmul.f32 %v769, %v865
          %v882 = vmul.f32 %v770, %v866
          %v883 = vmul.f32 %v771, %v867
          %v884 = vmul.f32 %v772, %v868
          %v885 = vmul.f32 %v773, %v869
          %v886 = vmul.f32 %v774, %v870
          %v887 = vmul.f32 %v775, %v871
          %v888 = vmul.f32 %v776, %v872
          %v889 = vmul.f32 %v777, %v873
          %v890 = vmul.f32 %v778, %v874
          %v891 = vmul.f32 %v779, %v875
          %v892 = vmul.f32 %v780, %v876
          %v893 = vmul.f32 %v781, %v877
          %v894 = vmul.f32 %v782, %v878
          %v895 = vmul.f32 %v783, %v879
          %v896 = vld [vmem:[%s3] sm:$0x1]
          %v898 = vlaneseq
          %v899 = vshrl.u32 %v898, 7
          %v900 = vsub.s32 0, %v899
          %v901 = vrot.slane %v896, %v900
          %v903 = vmul.f32 %v880, %v901
          %v904 = vmul.f32 %v881, %v901
          %v905 = vmul.f32 %v882, %v901
          %v906 = vmul.f32 %v883, %v901
          %v907 = vmul.f32 %v884, %v901
          %v908 = vmul.f32 %v885, %v901
          %v909 = vmul.f32 %v886, %v901
          %v910 = vmul.f32 %v887, %v901
          %v911 = vmul.f32 %v888, %v901
          %v912 = vmul.f32 %v889, %v901
          %v913 = vmul.f32 %v890, %v901
          %v914 = vmul.f32 %v891, %v901
          %v915 = vmul.f32 %v892, %v901
          %v916 = vmul.f32 %v893, %v901
          %v917 = vmul.f32 %v894, %v901
          %v918 = vmul.f32 %v895, %v901
          %v919 = vld [vmem:[%s4] sm:$0x1]
          %v921 = vlaneseq
          %v922 = vshrl.u32 %v921, 7
          %v923 = vsub.s32 0, %v922
          %v924 = vrot.slane %v919, %v923
          %v926 = vadd.f32 %v903, %v924
          %v927 = vadd.f32 %v904, %v924
          %v928 = vadd.f32 %v905, %v924
          %v929 = vadd.f32 %v906, %v924
          %v930 = vadd.f32 %v907, %v924
          %v931 = vadd.f32 %v908, %v924
          %v932 = vadd.f32 %v909, %v924
          %v933 = vadd.f32 %v910, %v924
          %v934 = vadd.f32 %v911, %v924
          %v935 = vadd.f32 %v912, %v924
          %v936 = vadd.f32 %v913, %v924
          %v937 = vadd.f32 %v914, %v924
          %v938 = vadd.f32 %v915, %v924
          %v939 = vadd.f32 %v916, %v924
          %v940 = vadd.f32 %v917, %v924
          %v941 = vadd.f32 %v918, %v924
          %v942 = vpack.c.bf16 %v927, %v926
          %v943 = vpack.c.bf16 %v929, %v928
          %v944 = vpack.c.bf16 %v931, %v930
          %v945 = vpack.c.bf16 %v933, %v932
          %v946 = vpack.c.bf16 %v935, %v934
          %v947 = vpack.c.bf16 %v937, %v936
          %v948 = vpack.c.bf16 %v939, %v938
          %v949 = vpack.c.bf16 %v941, %v940
          %950 = vst [vmem:[#allocation2] sm:$0xff] %v942
          %951 = vst [vmem:[#allocation2 + $0x8] sm:$0xff] %v943
          %952 = vst [vmem:[#allocation2 + $0x10] sm:$0xff] %v944
          %953 = vst [vmem:[#allocation2 + $0x18] sm:$0xff] %v945
          %954 = vst [vmem:[#allocation2 + $0x20] sm:$0xff] %v946
          %955 = vst [vmem:[#allocation2 + $0x28] sm:$0xff] %v947
          %956 = vst [vmem:[#allocation2 + $0x30] sm:$0xff] %v948
          %957 = vst [vmem:[#allocation2 + $0x38] sm:$0xff] %v949
        $region64: #{tpu_custom_call.1} parent=47 // pred_fallthru
          _
        %v958 = vld [vmem:[#allocation2] sm:$0xff]
        %v959 = vld [vmem:[#allocation2 + $0x8] sm:$0xff]
        %v960 = vld [vmem:[#allocation2 + $0x10] sm:$0xff]
        %v961 = vld [vmem:[#allocation2 + $0x18] sm:$0xff]
        %v962 = vld [vmem:[#allocation2 + $0x20] sm:$0xff]
        %v963 = vld [vmem:[#allocation2 + $0x28] sm:$0xff]
        %v964 = vld [vmem:[#allocation2 + $0x30] sm:$0xff]
        %v965 = vld [vmem:[#allocation2 + $0x38] sm:$0xff]
        %v966 = vld [vmem:[%s326] sm:$0xff]
        %v967 = vld [vmem:[%s326 + $0x8] sm:$0xff]
        %v968 = vld [vmem:[%s326 + $0x10] sm:$0xff]
        %v969 = vld [vmem:[%s326 + $0x18] sm:$0xff]
        %v970 = vld [vmem:[%s326 + $0x20] sm:$0xff]
        %v971 = vld [vmem:[%s326 + $0x28] sm:$0xff]
        %v972 = vld [vmem:[%s326 + $0x30] sm:$0xff]
        %v973 = vld [vmem:[%s326 + $0x38] sm:$0xff]
        %v974 = vld [vmem:[%s326 + $0x40] sm:$0xff]
        %v975 = vld [vmem:[%s326 + $0x48] sm:$0xff]
        %v976 = vld [vmem:[%s326 + $0x50] sm:$0xff]
        %v977 = vld [vmem:[%s326 + $0x58] sm:$0xff]
        %v978 = vld [vmem:[%s326 + $0x60] sm:$0xff]
        %v979 = vld [vmem:[%s326 + $0x68] sm:$0xff]
        %v980 = vld [vmem:[%s326 + $0x70] sm:$0xff]
        %v981 = vld [vmem:[%s326 + $0x78] sm:$0xff]
        %v982 = vld [vmem:[%s326 + $0x80] sm:$0xff]
        %v983 = vld [vmem:[%s326 + $0x88] sm:$0xff]
        %v984 = vld [vmem:[%s326 + $0x90] sm:$0xff]
        %v985 = vld [vmem:[%s326 + $0x98] sm:$0xff]
        %v986 = vld [vmem:[%s326 + $0xa0] sm:$0xff]
        %v987 = vld [vmem:[%s326 + $0xa8] sm:$0xff]
        %v988 = vld [vmem:[%s326 + $0xb0] sm:$0xff]
        %v989 = vld [vmem:[%s326 + $0xb8] sm:$0xff]
        %v990 = vld [vmem:[%s326 + $0xc0] sm:$0xff]
        %v991 = vld [vmem:[%s326 + $0xc8] sm:$0xff]
        %v992 = vld [vmem:[%s326 + $0xd0] sm:$0xff]
        %v993 = vld [vmem:[%s326 + $0xd8] sm:$0xff]
        %v994 = vld [vmem:[%s326 + $0xe0] sm:$0xff]
        %v995 = vld [vmem:[%s326 + $0xe8] sm:$0xff]
        %v996 = vld [vmem:[%s326 + $0xf0] sm:$0xff]
        %v997 = vld [vmem:[%s326 + $0xf8] sm:$0xff]
        %v998 = vld [vmem:[%s366] sm:$0xf]
        %v1000 = vlaneseq
        %v1001 = vshrl.u32 %v1000, 7
        %v1002 = vsub.s32 0, %v1001
        %v1003 = vrot.slane %v998, %v1002
        %v1004 = vlaneseq
        %v1005 = vshrl.u32 %v1004, 7
        %v1006 = vsub.s32 1, %v1005
        %v1007 = vrot.slane %v998, %v1006
        %v1008 = vlaneseq
        %v1009 = vshrl.u32 %v1008, 7
        %v1010 = vsub.s32 2, %v1009
        %v1011 = vrot.slane %v998, %v1010
        %v1012 = vlaneseq
        %v1013 = vshrl.u32 %v1012, 7
        %v1014 = vsub.s32 3, %v1013
        %v1015 = vrot.slane %v998, %v1014
        %v1052 = vunpack.c.l.b16 %v966
        %v1053 = vunpack.c.h.b16 %v966
        %v1054 = vunpack.c.l.b16 %v967
        %v1055 = vunpack.c.h.b16 %v967
        %v1056 = vunpack.c.l.b16 %v968
        %v1057 = vunpack.c.h.b16 %v968
        %v1058 = vunpack.c.l.b16 %v969
        %v1059 = vunpack.c.h.b16 %v969
        %v1060 = vunpack.c.l.b16 %v970
        %v1061 = vunpack.c.h.b16 %v970
        %v1062 = vunpack.c.l.b16 %v971
        %v1063 = vunpack.c.h.b16 %v971
        %v1064 = vunpack.c.l.b16 %v972
        %v1065 = vunpack.c.h.b16 %v972
        %v1066 = vunpack.c.l.b16 %v973
        %v1067 = vunpack.c.h.b16 %v973
        %v1068 = vunpack.c.l.b16 %v974
        %v1069 = vunpack.c.h.b16 %v974
        %v1070 = vunpack.c.l.b16 %v975
        %v1071 = vunpack.c.h.b16 %v975
        %v1072 = vunpack.c.l.b16 %v976
        %v1073 = vunpack.c.h.b16 %v976
        %v1074 = vunpack.c.l.b16 %v977
        %v1075 = vunpack.c.h.b16 %v977
        %v1076 = vunpack.c.l.b16 %v978
        %v1077 = vunpack.c.h.b16 %v978
        %v1078 = vunpack.c.l.b16 %v979
        %v1079 = vunpack.c.h.b16 %v979
        %v1080 = vunpack.c.l.b16 %v980
        %v1081 = vunpack.c.h.b16 %v980
        %v1082 = vunpack.c.l.b16 %v981
        %v1083 = vunpack.c.h.b16 %v981
        %v1084 = vunpack.c.l.b16 %v982
        %v1085 = vunpack.c.h.b16 %v982
        %v1086 = vunpack.c.l.b16 %v983
        %v1087 = vunpack.c.h.b16 %v983
        %v1088 = vunpack.c.l.b16 %v984
        %v1089 = vunpack.c.h.b16 %v984
        %v1090 = vunpack.c.l.b16 %v985
        %v1091 = vunpack.c.h.b16 %v985
        %v1092 = vunpack.c.l.b16 %v986
        %v1093 = vunpack.c.h.b16 %v986
        %v1094 = vunpack.c.l.b16 %v987
        %v1095 = vunpack.c.h.b16 %v987
        %v1096 = vunpack.c.l.b16 %v988
        %v1097 = vunpack.c.h.b16 %v988
        %v1098 = vunpack.c.l.b16 %v989
        %v1099 = vunpack.c.h.b16 %v989
        %v1100 = vunpack.c.l.b16 %v990
        %v1101 = vunpack.c.h.b16 %v990
        %v1102 = vunpack.c.l.b16 %v991
        %v1103 = vunpack.c.h.b16 %v991
        %v1104 = vunpack.c.l.b16 %v992
        %v1105 = vunpack.c.h.b16 %v992
        %v1106 = vunpack.c.l.b16 %v993
        %v1107 = vunpack.c.h.b16 %v993
        %v1108 = vunpack.c.l.b16 %v994
        %v1109 = vunpack.c.h.b16 %v994
        %v1110 = vunpack.c.l.b16 %v995
        %v1111 = vunpack.c.h.b16 %v995
        %v1112 = vunpack.c.l.b16 %v996
        %v1113 = vunpack.c.h.b16 %v996
        %v1114 = vunpack.c.l.b16 %v997
        %v1115 = vunpack.c.h.b16 %v997
        %v1116 = vpack.c.b16 %v1056, %v1052
        %v1117 = vpack.c.b16 %v1057, %v1053
        %v1118 = vpack.c.b16 %v1058, %v1054
        %v1119 = vpack.c.b16 %v1059, %v1055
        %v1120 = vpack.c.b16 %v1064, %v1060
        %v1121 = vpack.c.b16 %v1065, %v1061
        %v1122 = vpack.c.b16 %v1066, %v1062
        %v1123 = vpack.c.b16 %v1067, %v1063
        %v1124 = vpack.c.b16 %v1072, %v1068
        %v1125 = vpack.c.b16 %v1073, %v1069
        %v1126 = vpack.c.b16 %v1074, %v1070
        %v1127 = vpack.c.b16 %v1075, %v1071
        %v1128 = vpack.c.b16 %v1080, %v1076
        %v1129 = vpack.c.b16 %v1081, %v1077
        %v1130 = vpack.c.b16 %v1082, %v1078
        %v1131 = vpack.c.b16 %v1083, %v1079
        %v1132 = vpack.c.b16 %v1088, %v1084
        %v1133 = vpack.c.b16 %v1089, %v1085
        %v1134 = vpack.c.b16 %v1090, %v1086
        %v1135 = vpack.c.b16 %v1091, %v1087
        %v1136 = vpack.c.b16 %v1096, %v1092
        %v1137 = vpack.c.b16 %v1097, %v1093
        %v1138 = vpack.c.b16 %v1098, %v1094
        %v1139 = vpack.c.b16 %v1099, %v1095
        %v1140 = vpack.c.b16 %v1104, %v1100
        %v1141 = vpack.c.b16 %v1105, %v1101
        %v1142 = vpack.c.b16 %v1106, %v1102
        %v1143 = vpack.c.b16 %v1107, %v1103
        %v1144 = vpack.c.b16 %v1112, %v1108
        %v1145 = vpack.c.b16 %v1113, %v1109
        %v1146 = vpack.c.b16 %v1114, %v1110
        %v1147 = vpack.c.b16 %v1115, %v1111
        %1180 = vmatprep.subr.bf16.mxu0 %v1117
        %1181 = vmatpush1.bf16.msra.mxu0 %v1116
        %1182 = vmatprep.subr.bf16.mxu0 %v1121
        %1183 = vmatpush1.bf16.msra.mxu0 %v1120
        %1184 = vmatprep.subr.bf16.mxu0 %v1125
        %1185 = vmatpush1.bf16.msra.mxu0 %v1124
        %1186 = vmatprep.subr.bf16.mxu0 %v1129
        %1187 = vmatpush1.bf16.msra.mxu0 %v1128
        %1188 = vmatprep.subr.bf16.mxu0 %v1133
        %1189 = vmatpush1.bf16.msra.mxu0 %v1132
        %1190 = vmatprep.subr.bf16.mxu0 %v1137
        %1191 = vmatpush1.bf16.msra.mxu0 %v1136
        %1192 = vmatprep.subr.bf16.mxu0 %v1141
        %1193 = vmatpush1.bf16.msra.mxu0 %v1140
        %1194 = vmatprep.subr.bf16.mxu0 %v1145
        %1195 = vmatpush1.bf16.msra.mxu0 %v1144
        %1196 = vmatprep.subr.bf16.mxu0 0
        %1197 = vmatpush1.bf16.msra.mxu0 0
        %1198 = vmatprep.subr.bf16.mxu0 0
        %1199 = vmatpush1.bf16.msra.mxu0 0
        %1200 = vmatprep.subr.bf16.mxu0 0
        %1201 = vmatpush1.bf16.msra.mxu0 0
        %1202 = vmatprep.subr.bf16.mxu0 0
        %1203 = vmatpush1.bf16.msra.mxu0 0
        %1204 = vmatprep.subr.bf16.mxu0 0
        %1205 = vmatpush1.bf16.msra.mxu0 0
        %1206 = vmatprep.subr.bf16.mxu0 0
        %1207 = vmatpush1.bf16.msra.mxu0 0
        %1208 = vmatprep.subr.bf16.mxu0 0
        %1209 = vmatpush1.bf16.msra.mxu0 0
        %1210 = vmatprep.subr.bf16.mxu0 0
        %1211 = vmatpush1.bf16.msra.mxu0 0
        %1212 = vmatprep.mubr.bf16.mxu0 0
        %1213 = vmatmul.mubr.bf16.gmra.mrb[0].mxu0 %v958
        %v1214 = vpop.f32.mrb[0].mxu0
        %v1215 = vadd.f32 %v1003, %v1214
        %v1216 = vpop.f32.mrb[0].mxu0
        %v1217 = vadd.f32 %v1007, %v1216
        %v1218 = vpop.f32.mrb[0].mxu0
        %v1219 = vadd.f32 %v1003, %v1218
        %v1220 = vpop.f32.mrb[0].mxu0
        %v1221 = vadd.f32 %v1007, %v1220
        %1222 = vmatprep.mubr.bf16.mxu0 0
        %1223 = vmatmul.mubr.bf16.gmra.mrb[0].mxu0 %v959
        %v1224 = vpop.f32.mrb[0].mxu0
        %v1225 = vadd.f32 %v1003, %v1224
        %v1226 = vpop.f32.mrb[0].mxu0
        %v1227 = vadd.f32 %v1007, %v1226
        %v1228 = vpop.f32.mrb[0].mxu0
        %v1229 = vadd.f32 %v1003, %v1228
        %v1230 = vpop.f32.mrb[0].mxu0
        %v1231 = vadd.f32 %v1007, %v1230
        %1232 = vmatprep.mubr.bf16.mxu0 0
        %1233 = vmatmul.mubr.bf16.gmra.mrb[0].mxu0 %v960
        %v1234 = vpop.f32.mrb[0].mxu0
        %v1235 = vadd.f32 %v1003, %v1234
        %v1236 = vpop.f32.mrb[0].mxu0
        %v1237 = vadd.f32 %v1007, %v1236
        %v1238 = vpop.f32.mrb[0].mxu0
        %v1239 = vadd.f32 %v1003, %v1238
        %v1240 = vpop.f32.mrb[0].mxu0
        %v1241 = vadd.f32 %v1007, %v1240
        %1242 = vmatprep.mubr.bf16.mxu0 0
        %1243 = vmatmul.mubr.bf16.gmra.mrb[0].mxu0 %v961
        %v1244 = vpop.f32.mrb[0].mxu0
        %v1245 = vadd.f32 %v1003, %v1244
        %v1246 = vpop.f32.mrb[0].mxu0
        %v1247 = vadd.f32 %v1007, %v1246
        %v1248 = vpop.f32.mrb[0].mxu0
        %v1249 = vadd.f32 %v1003, %v1248
        %v1250 = vpop.f32.mrb[0].mxu0
        %v1251 = vadd.f32 %v1007, %v1250
        %1252 = vmatprep.mubr.bf16.mxu0 0
        %1253 = vmatmul.mubr.bf16.gmra.mrb[0].mxu0 %v962
        %v1254 = vpop.f32.mrb[0].mxu0
        %v1255 = vadd.f32 %v1003, %v1254
        %v1256 = vpop.f32.mrb[0].mxu0
        %v1257 = vadd.f32 %v1007, %v1256
        %v1258 = vpop.f32.mrb[0].mxu0
        %v1259 = vadd.f32 %v1003, %v1258
        %v1260 = vpop.f32.mrb[0].mxu0
        %v1261 = vadd.f32 %v1007, %v1260
        %1262 = vmatprep.mubr.bf16.mxu0 0
        %1263 = vmatmul.mubr.bf16.gmra.mrb[0].mxu0 %v963
        %v1264 = vpop.f32.mrb[0].mxu0
        %v1265 = vadd.f32 %v1003, %v1264
        %v1266 = vpop.f32.mrb[0].mxu0
        %v1267 = vadd.f32 %v1007, %v1266
        %v1268 = vpop.f32.mrb[0].mxu0
        %v1269 = vadd.f32 %v1003, %v1268
        %v1270 = vpop.f32.mrb[0].mxu0
        %v1271 = vadd.f32 %v1007, %v1270
        %1272 = vmatprep.mubr.bf16.mxu0 0
        %1273 = vmatmul.mubr.bf16.gmra.mrb[0].mxu0 %v964
        %v1274 = vpop.f32.mrb[0].mxu0
        %v1275 = vadd.f32 %v1003, %v1274
        %v1276 = vpop.f32.mrb[0].mxu0
        %v1277 = vadd.f32 %v1007, %v1276
        %v1278 = vpop.f32.mrb[0].mxu0
        %v1279 = vadd.f32 %v1003, %v1278
        %v1280 = vpop.f32.mrb[0].mxu0
        %v1281 = vadd.f32 %v1007, %v1280
        %1282 = vmatprep.mubr.bf16.mxu0 0
        %1283 = vmatmul.mubr.bf16.gmra.mrb[0].mxu0 %v965
        %v1284 = vpop.f32.mrb[0].mxu0
        %v1285 = vadd.f32 %v1003, %v1284
        %v1286 = vpop.f32.mrb[0].mxu0
        %v1287 = vadd.f32 %v1007, %v1286
        %v1288 = vpop.f32.mrb[0].mxu0
        %v1289 = vadd.f32 %v1003, %v1288
        %v1290 = vpop.f32.mrb[0].mxu0
        %v1291 = vadd.f32 %v1007, %v1290
        %1292 = vdwg.mxu0
        %1293 = vmatprep.subr.bf16.mxu0 %v1119
        %1294 = vmatpush1.bf16.msra.mxu0 %v1118
        %1295 = vmatprep.subr.bf16.mxu0 %v1123
        %1296 = vmatpush1.bf16.msra.mxu0 %v1122
        %1297 = vmatprep.subr.bf16.mxu0 %v1127
        %1298 = vmatpush1.bf16.msra.mxu0 %v1126
        %1299 = vmatprep.subr.bf16.mxu0 %v1131
        %1300 = vmatpush1.bf16.msra.mxu0 %v1130
        %1301 = vmatprep.subr.bf16.mxu0 %v1135
        %1302 = vmatpush1.bf16.msra.mxu0 %v1134
        %1303 = vmatprep.subr.bf16.mxu0 %v1139
        %1304 = vmatpush1.bf16.msra.mxu0 %v1138
        %1305 = vmatprep.subr.bf16.mxu0 %v1143
        %1306 = vmatpush1.bf16.msra.mxu0 %v1142
        %1307 = vmatprep.subr.bf16.mxu0 %v1147
        %1308 = vmatpush1.bf16.msra.mxu0 %v1146
        %1309 = vmatprep.subr.bf16.mxu0 0
        %1310 = vmatpush1.bf16.msra.mxu0 0
        %1311 = vmatprep.subr.bf16.mxu0 0
        %1312 = vmatpush1.bf16.msra.mxu0 0
        %1313 = vmatprep.subr.bf16.mxu0 0
        %1314 = vmatpush1.bf16.msra.mxu0 0
        %1315 = vmatprep.subr.bf16.mxu0 0
        %1316 = vmatpush1.bf16.msra.mxu0 0
        %1317 = vmatprep.subr.bf16.mxu0 0
        %1318 = vmatpush1.bf16.msra.mxu0 0
        %1319 = vmatprep.subr.bf16.mxu0 0
        %1320 = vmatpush1.bf16.msra.mxu0 0
        %1321 = vmatprep.subr.bf16.mxu0 0
        %1322 = vmatpush1.bf16.msra.mxu0 0
        %1323 = vmatprep.subr.bf16.mxu0 0
        %1324 = vmatpush1.bf16.msra.mxu0 0
        %1325 = vmatprep.mubr.bf16.mxu0 0
        %1326 = vmatmul.mubr.bf16.gmra.mrb[0].mxu0 %v958
        %v1327 = vpop.f32.mrb[0].mxu0
        %v1328 = vadd.f32 %v1011, %v1327
        %v1329 = vpop.f32.mrb[0].mxu0
        %v1330 = vadd.f32 %v1015, %v1329
        %v1331 = vpop.f32.mrb[0].mxu0
        %v1332 = vadd.f32 %v1011, %v1331
        %v1333 = vpop.f32.mrb[0].mxu0
        %v1334 = vadd.f32 %v1015, %v1333
        %1335 = vmatprep.mubr.bf16.mxu0 0
        %1336 = vmatmul.mubr.bf16.gmra.mrb[0].mxu0 %v959
        %v1337 = vpop.f32.mrb[0].mxu0
        %v1338 = vadd.f32 %v1011, %v1337
        %v1339 = vpop.f32.mrb[0].mxu0
        %v1340 = vadd.f32 %v1015, %v1339
        %v1341 = vpop.f32.mrb[0].mxu0
        %v1342 = vadd.f32 %v1011, %v1341
        %v1343 = vpop.f32.mrb[0].mxu0
        %v1344 = vadd.f32 %v1015, %v1343
        %1345 = vmatprep.mubr.bf16.mxu0 0
        %1346 = vmatmul.mubr.bf16.gmra.mrb[0].mxu0 %v960
        %v1347 = vpop.f32.mrb[0].mxu0
        %v1348 = vadd.f32 %v1011, %v1347
        %v1349 = vpop.f32.mrb[0].mxu0
        %v1350 = vadd.f32 %v1015, %v1349
        %v1351 = vpop.f32.mrb[0].mxu0
        %v1352 = vadd.f32 %v1011, %v1351
        %v1353 = vpop.f32.mrb[0].mxu0
        %v1354 = vadd.f32 %v1015, %v1353
        %1355 = vmatprep.mubr.bf16.mxu0 0
        %1356 = vmatmul.mubr.bf16.gmra.mrb[0].mxu0 %v961
        %v1357 = vpop.f32.mrb[0].mxu0
        %v1358 = vadd.f32 %v1011, %v1357
        %v1359 = vpop.f32.mrb[0].mxu0
        %v1360 = vadd.f32 %v1015, %v1359
        %v1361 = vpop.f32.mrb[0].mxu0
        %v1362 = vadd.f32 %v1011, %v1361
        %v1363 = vpop.f32.mrb[0].mxu0
        %v1364 = vadd.f32 %v1015, %v1363
        %1365 = vmatprep.mubr.bf16.mxu0 0
        %1366 = vmatmul.mubr.bf16.gmra.mrb[0].mxu0 %v962
        %v1367 = vpop.f32.mrb[0].mxu0
        %v1368 = vadd.f32 %v1011, %v1367
        %v1369 = vpop.f32.mrb[0].mxu0
        %v1370 = vadd.f32 %v1015, %v1369
        %v1371 = vpop.f32.mrb[0].mxu0
        %v1372 = vadd.f32 %v1011, %v1371
        %v1373 = vpop.f32.mrb[0].mxu0
        %v1374 = vadd.f32 %v1015, %v1373
        %1375 = vmatprep.mubr.bf16.mxu0 0
        %1376 = vmatmul.mubr.bf16.gmra.mrb[0].mxu0 %v963
        %v1377 = vpop.f32.mrb[0].mxu0
        %v1378 = vadd.f32 %v1011, %v1377
        %v1379 = vpop.f32.mrb[0].mxu0
        %v1380 = vadd.f32 %v1015, %v1379
        %v1381 = vpop.f32.mrb[0].mxu0
        %v1382 = vadd.f32 %v1011, %v1381
        %v1383 = vpop.f32.mrb[0].mxu0
        %v1384 = vadd.f32 %v1015, %v1383
        %1385 = vmatprep.mubr.bf16.mxu0 0
        %1386 = vmatmul.mubr.bf16.gmra.mrb[0].mxu0 %v964
        %v1387 = vpop.f32.mrb[0].mxu0
        %v1388 = vadd.f32 %v1011, %v1387
        %v1389 = vpop.f32.mrb[0].mxu0
        %v1390 = vadd.f32 %v1015, %v1389
        %v1391 = vpop.f32.mrb[0].mxu0
        %v1392 = vadd.f32 %v1011, %v1391
        %v1393 = vpop.f32.mrb[0].mxu0
        %v1394 = vadd.f32 %v1015, %v1393
        %1395 = vmatprep.mubr.bf16.mxu0 0
        %1396 = vmatmul.mubr.bf16.gmra.mrb[0].mxu0 %v965
        %v1397 = vpop.f32.mrb[0].mxu0
        %v1398 = vadd.f32 %v1011, %v1397
        %v1399 = vpop.f32.mrb[0].mxu0
        %v1400 = vadd.f32 %v1015, %v1399
        %v1401 = vpop.f32.mrb[0].mxu0
        %v1402 = vadd.f32 %v1011, %v1401
        %v1403 = vpop.f32.mrb[0].mxu0
        %v1404 = vadd.f32 %v1015, %v1403
        %1405 = vdwg.mxu0
        %1406 = vst [vmem:[%s360] sm:$0xff] %v1215
        %1407 = vst [vmem:[%s360 + $0x8] sm:$0xff] %v1217
        %1408 = vst [vmem:[%s360 + $0x10] sm:$0xff] %v1328
        %1409 = vst [vmem:[%s360 + $0x18] sm:$0xff] %v1330
        %1410 = vst [vmem:[%s360 + $0x20] sm:$0xff] %v1219
        %1411 = vst [vmem:[%s360 + $0x28] sm:$0xff] %v1221
        %1412 = vst [vmem:[%s360 + $0x30] sm:$0xff] %v1332
        %1413 = vst [vmem:[%s360 + $0x38] sm:$0xff] %v1334
        %1414 = vst [vmem:[%s360 + $0x40] sm:$0xff] %v1225
        %1415 = vst [vmem:[%s360 + $0x48] sm:$0xff] %v1227
        %1416 = vst [vmem:[%s360 + $0x50] sm:$0xff] %v1338
        %1417 = vst [vmem:[%s360 + $0x58] sm:$0xff] %v1340
        %1418 = vst [vmem:[%s360 + $0x60] sm:$0xff] %v1229
        %1419 = vst [vmem:[%s360 + $0x68] sm:$0xff] %v1231
        %1420 = vst [vmem:[%s360 + $0x70] sm:$0xff] %v1342
        %1421 = vst [vmem:[%s360 + $0x78] sm:$0xff] %v1344
        %1422 = vst [vmem:[%s360 + $0x80] sm:$0xff] %v1235
        %1423 = vst [vmem:[%s360 + $0x88] sm:$0xff] %v1237
        %1424 = vst [vmem:[%s360 + $0x90] sm:$0xff] %v1348
        %1425 = vst [vmem:[%s360 + $0x98] sm:$0xff] %v1350
        %1426 = vst [vmem:[%s360 + $0xa0] sm:$0xff] %v1239
        %1427 = vst [vmem:[%s360 + $0xa8] sm:$0xff] %v1241
        %1428 = vst [vmem:[%s360 + $0xb0] sm:$0xff] %v1352
        %1429 = vst [vmem:[%s360 + $0xb8] sm:$0xff] %v1354
        %1430 = vst [vmem:[%s360 + $0xc0] sm:$0xff] %v1245
        %1431 = vst [vmem:[%s360 + $0xc8] sm:$0xff] %v1247
        %1432 = vst [vmem:[%s360 + $0xd0] sm:$0xff] %v1358
        %1433 = vst [vmem:[%s360 + $0xd8] sm:$0xff] %v1360
        %1434 = vst [vmem:[%s360 + $0xe0] sm:$0xff] %v1249
        %1435 = vst [vmem:[%s360 + $0xe8] sm:$0xff] %v1251
        %1436 = vst [vmem:[%s360 + $0xf0] sm:$0xff] %v1362
        %1437 = vst [vmem:[%s360 + $0xf8] sm:$0xff] %v1364
        %1438 = vst [vmem:[%s360 + $0x100] sm:$0xff] %v1255
        %1439 = vst [vmem:[%s360 + $0x108] sm:$0xff] %v1257
        %1440 = vst [vmem:[%s360 + $0x110] sm:$0xff] %v1368
        %1441 = vst [vmem:[%s360 + $0x118] sm:$0xff] %v1370
        %1442 = vst [vmem:[%s360 + $0x120] sm:$0xff] %v1259
        %1443 = vst [vmem:[%s360 + $0x128] sm:$0xff] %v1261
        %1444 = vst [vmem:[%s360 + $0x130] sm:$0xff] %v1372
        %1445 = vst [vmem:[%s360 + $0x138] sm:$0xff] %v1374
        %1446 = vst [vmem:[%s360 + $0x140] sm:$0xff] %v1265
        %1447 = vst [vmem:[%s360 + $0x148] sm:$0xff] %v1267
        %1448 = vst [vmem:[%s360 + $0x150] sm:$0xff] %v1378
        %1449 = vst [vmem:[%s360 + $0x158] sm:$0xff] %v1380
        %1450 = vst [vmem:[%s360 + $0x160] sm:$0xff] %v1269
        %1451 = vst [vmem:[%s360 + $0x168] sm:$0xff] %v1271
        %1452 = vst [vmem:[%s360 + $0x170] sm:$0xff] %v1382
        %1453 = vst [vmem:[%s360 + $0x178] sm:$0xff] %v1384
        %1454 = vst [vmem:[%s360 + $0x180] sm:$0xff] %v1275
        %1455 = vst [vmem:[%s360 + $0x188] sm:$0xff] %v1277
        %1456 = vst [vmem:[%s360 + $0x190] sm:$0xff] %v1388
        %1457 = vst [vmem:[%s360 + $0x198] sm:$0xff] %v1390
        %1458 = vst [vmem:[%s360 + $0x1a0] sm:$0xff] %v1279
        %1459 = vst [vmem:[%s360 + $0x1a8] sm:$0xff] %v1281
        %1460 = vst [vmem:[%s360 + $0x1b0] sm:$0xff] %v1392
        %1461 = vst [vmem:[%s360 + $0x1b8] sm:$0xff] %v1394
        %1462 = vst [vmem:[%s360 + $0x1c0] sm:$0xff] %v1285
        %1463 = vst [vmem:[%s360 + $0x1c8] sm:$0xff] %v1287
        %1464 = vst [vmem:[%s360 + $0x1d0] sm:$0xff] %v1398
        %1465 = vst [vmem:[%s360 + $0x1d8] sm:$0xff] %v1400
        %1466 = vst [vmem:[%s360 + $0x1e0] sm:$0xff] %v1289
        %1467 = vst [vmem:[%s360 + $0x1e8] sm:$0xff] %v1291
        %1468 = vst [vmem:[%s360 + $0x1f0] sm:$0xff] %v1402
        %1469 = vst [vmem:[%s360 + $0x1f8] sm:$0xff] %v1404
        %s1470 = sand.u32 %s207, 1
        %s1471 = scalar_lea.sflag [#allocation5], %s1470
        %s1472 = sand.u32 %s207, 1
        %s1473 = smul.addr %s1472, 512
        %s1474 = scalar_lea.vmem [#allocation9], %s1473
        // Predicated region
        $region65: #{tpu_custom_call.1} parent=47 // pred_check
          %p1475 = pneg %p217
        $region66: #{tpu_custom_call.1} parent=47 // pred_check_branch
          %1477 = sbr.rel (%p1475) target = $region68
        $region67: #{tpu_custom_call.1} parent=47 // pred_region
          %s1478 = smul.u32 16, %s27
          %s1479 = smul.u32 4, %s28
          %s1481 = ssub.s32 8192, 8192
          %1482 = vsyncadd %s1471, %s1481
          %s1483 = smul.addr %s1478, 8
          %s1484 = sadd.s32 %s1479, %s1483
          %s1485 = smul.addr %s1484, 128
          %s1486 = scalar_lea.hbm %s7, %s1485
          %s1487 = sshll.u32 %s1474, 4
          %s1488 = int_to_ptr.vmem [resolvable:$true] %s1487
          %1493 = dma.vmem_to_hbm [thread:$0]  %s1488, 8192, %s1486, %s1471, 512, 1024, 32
        $region68: #{tpu_custom_call.1} parent=47 // pred_fallthru
          _
      $region48: #{tpu_custom_call.1} parent=5 // pred_fallthru
        _
      %p1494 = scmp.le.s32.totalorder 2, %s18
      // Predicated region
      $region69: #{tpu_custom_call.1} parent=5 // pred_check
        %p1495 = pneg %p1494
      $region70: #{tpu_custom_call.1} parent=5 // pred_check_branch
        %1497 = sbr.rel (%p1495) target = $region72
      $region71: #{tpu_custom_call.1} parent=5 // pred_region
        %s1498 = ssub.s32 %s18, 2
        // Predicated region
        $region73: #{tpu_custom_call.1} parent=71 // pred_check
          %p1499 = pneg %p223
        $region74: #{tpu_custom_call.1} parent=71 // pred_check_branch
          %1501 = sbr.rel (%p1499) target = $region76
        $region75: #{tpu_custom_call.1} parent=71 // pred_region
          %s1502 = sand.u32 %s208, 1
          %s1503 = scalar_lea.sflag [#allocation5], %s1502
          %s1504 = sand.u32 %s208, 1
          %s1505 = smul.addr %s1504, 512
          %s1506 = scalar_lea.vmem [#allocation9], %s1505
          %1507 = dma.done %s1503, 8192
        $region76: #{tpu_custom_call.1} parent=71 // pred_fallthru
          _
      $region72: #{tpu_custom_call.1} parent=5 // pred_fallthru
        _
    $region6: #{tpu_custom_call.1} parent=1 // loop_footer
      %s22 = sadd.s32 1, %s18
    $region7: #{tpu_custom_call.1} parent=1 // loop_footer_branch
      %17 = sbr.rel target = $region3
    $region8: #{tpu_custom_call.1} parent=1 // loop_exit
      _
    %1508 = vsyncpa [#allocation4], 1
    %s1509 = scalar_lea.sflag [#allocation4], 1
    %1510 = vsyncpa %s1509, 1
    %1511 = vsyncpa [#allocation7], 1
    %1512 = vsyncpa [#allocation5], 1
    %s1513 = scalar_lea.sflag [#allocation5], 1
    %1514 = vsyncpa %s1513, 1

</llo_original>
